<compile_context>
chip_gen: v6e
topology: v6e:2x2x1
jax: 0.10.0
libtpu: 0.0.40
codegen_flags: <defaults>
</compile_context>

<pallas_src>
import functools

import jax
import jax.numpy as jnp
from jax import lax
from jax.experimental import pallas as pl
from jax.experimental.pallas import tpu as pltpu


def _round_up(x, m):
    return (x + m - 1) // m * m


def _pick_tile_ho(Ho, Wo_pad):
    """Largest reasonable output-row tile: split only while the flattened output
    slab stays a multiple of 128 lanes and >= 256 lanes (keeps multiple parallel
    grid steps at real sizes, single big tile at toy sizes)."""
    tile_ho = Ho
    while (tile_ho % 2 == 0
           and ((tile_ho // 2) * Wo_pad) % 128 == 0
           and (tile_ho // 2) * Wo_pad >= 256):
        tile_ho //= 2
    return tile_ho


def _make_conv_kernel(K, s, Cin, Cout, tile_ho, Wo_pad):
    """Fused tap-accumulation conv + bias + LeakyReLU(0.01) kernel."""
    n_phase = s * s
    slab = tile_ho * Wo_pad

    def kernel(*refs):
        phase_refs = refs[:n_phase]          # each (1, Hq, Wq, Cin) in VMEM
        w_ref = refs[n_phase]                # (K*K, Cout, Cin), resident
        b_ref = refs[n_phase + 1]            # (Cout, 1), resident
        o_ref = refs[n_phase + 2]            # (1, Cout, slab)

        r0 = pl.program_id(1) * tile_ho      # first output row of this tile
        acc = jnp.zeros((Cout, slab), jnp.float32)

        # K*K taps, fully unrolled.  Each tap reads a contiguous window of one
        # stride-phase (fused im2col), flattens (tile_ho, Wo_pad) -> slab (layout
        # trivial since Wo_pad is a sublane multiple), and does a small MXU dot
        # contracting Cin, accumulating into the lane-dense (Cout, slab) tile.
        for kh in range(K):
            for kw in range(K):
                ph = phase_refs[(kh % s) * s + (kw % s)]
                oh, ow = kh // s, kw // s
                x_tap = ph[0, pl.ds(r0 + oh, tile_ho), pl.ds(ow, Wo_pad), :]
                x2 = x_tap.reshape(slab, Cin)
                w_tap = w_ref[kh * K + kw]                       # (Cout, Cin)
                acc += lax.dot_general(                          # (Cout, slab)
                    w_tap, x2, (((1,), (1,)), ((), ())),
                    preferred_element_type=jnp.float32)

        y = acc + b_ref[...]                                     # (Cout,1) bcast
        o_ref[0] = jnp.where(y > 0, y, jnp.float32(0.01) * y).astype(o_ref.dtype)

    return kernel


def leaky_relu_conv2d(x_nchw, weight, bias, *, kernel_size, stride, padding):
    """Forward pass of LeakyReLUConv2d.

    Args:
      x_nchw: (N, Cin, H, W) float32, PyTorch NCHW convention.
      weight: (Cout, Cin, K, K) float32, PyTorch Conv2d weight layout.
      bias:   (Cout,) float32.
    Returns:
      (N, Cout, Ho, Wo) float32.
    """
    N, Cin, H, W = x_nchw.shape
    Cout = weight.shape[0]
    K = kernel_size
    s = stride

    # --- wrapper glue (pure data movement, ~1x input bytes) ---
    x = x_nchw
    if padding > 0:
        x = jnp.pad(x, ((0, 0), (0, 0), (padding, padding), (padding, padding)),
                    mode="reflect")
    Hp, Wp = H + 2 * padding, W + 2 * padding
    Ho = (Hp - K) // s + 1
    Wo = (Wp - K) // s + 1

    # Pad output width to a sublane multiple so the in-kernel flatten is
    # layout-trivial; extra columns compute on zeros and are cropped below.
    Wo_pad = _round_up(Wo, 8)
    tile_ho = _pick_tile_ho(Ho, Wo_pad)
    n_hb = Ho // tile_ho
    slab = tile_ho * Wo_pad

    # Stride-phase split: phases[p*s+q][n, i, j, c] = x_padded[n, s*i+p, s*j+q, c].
    # Every conv tap then reads a *contiguous* window of exactly one phase.
    Hq = Ho + (K - 1) // s
    Wq = Wo_pad + (K - 1) // s
    He, We = s * Hq, s * Wq
    x_nhwc = jnp.transpose(x, (0, 2, 3, 1))                      # (N, Hp, Wp, Cin)
    x_ext = jnp.pad(x_nhwc, ((0, 0), (0, max(0, He - Hp)),
                             (0, max(0, We - Wp)), (0, 0)))[:, :He, :We, :]
    x_ph = x_ext.reshape(N, Hq, s, Wq, s, Cin)
    phases = [x_ph[:, :, p, :, q, :] for p in range(s) for q in range(s)]

    # Weight taps as (K*K, Cout, Cin); bias as a (Cout, 1) column.
    w_taps = jnp.transpose(weight, (2, 3, 0, 1)).reshape(K * K, Cout, Cin)
    b_col = bias.reshape(Cout, 1).astype(jnp.float32)

    # TODO(synk): for very large spatial extents the per-image phase block won't fit
    # VMEM; tile Ho with halo rows via manual pltpu.make_async_copy double-buffering.
    phase_spec = pl.BlockSpec((1, Hq, Wq, Cin), lambda n, hb: (n, 0, 0, 0))
    in_specs = [phase_spec] * (s * s) + [
        pl.BlockSpec((K * K, Cout, Cin), lambda n, hb: (0, 0, 0)),   # resident
        pl.BlockSpec((Cout, 1), lambda n, hb: (0, 0)),               # resident
    ]
    out_spec = pl.BlockSpec((1, Cout, slab), lambda n, hb: (n, 0, hb))

    out_flat = pl.pallas_call(
        _make_conv_kernel(K, s, Cin, Cout, tile_ho, Wo_pad),
        out_shape=jax.ShapeDtypeStruct((N, Cout, Ho * Wo_pad), jnp.float32),
        grid=(N, n_hb),
        in_specs=in_specs,
        out_specs=out_spec,
        compiler_params=pltpu.CompilerParams(
            dimension_semantics=("parallel", "parallel"),
            vmem_limit_bytes=48 * 1024 * 1024),
    )(*phases, w_taps, b_col)

    out = out_flat.reshape(N, Cout, Ho, Wo_pad)[:, :, :, :Wo]    # already NCHW
    return out


def _reference(x_nchw, weight, bias, *, kernel_size, stride, padding):
    """Pure-JAX reference (reflection pad + conv + bias + leaky relu)."""
    x = x_nchw
    if padding > 0:
        x = jnp.pad(x, ((0, 0), (0, 0), (padding, padding), (padding, padding)),
                    mode="reflect")
    y = lax.conv_general_dilated(
        x, weight, window_strides=(stride, stride), padding="VALID",
        dimension_numbers=("NCHW", "OIHW", "NCHW"))
    y = y + bias.reshape(1, -1, 1, 1)
    return jnp.where(y > 0, y, 0.01 * y)


if __name__ == "__main__":
    # Module config: LeakyReLUConv2d(n_in=4, n_out=8, kernel_size=3, stride=2, padding=1)
    N, Cin, H, W = 2, 4, 16, 16
    Cout, K, stride, padding = 8, 3, 2, 1

    key = jax.random.PRNGKey(0)
    kx, kw, kb = jax.random.split(key, 3)
    x = jax.random.normal(kx, (N, Cin, H, W), dtype=jnp.float32)
    # gaussian_weights_init: conv weights ~ N(0, 0.02).
    weight = 0.02 * jax.random.normal(kw, (Cout, Cin, K, K), dtype=jnp.float32)
    bias = 0.02 * jax.random.normal(kb, (Cout,), dtype=jnp.float32)

    fwd = functools.partial(leaky_relu_conv2d, kernel_size=K, stride=stride,
                            padding=padding)
    out = jax.block_until_ready(jax.jit(fwd)(x, weight, bias))

    ref = _reference(x, weight, bias, kernel_size=K, stride=stride, padding=padding)
    Ho = (H + 2 * padding - K) // stride + 1
    Wo = (W + 2 * padding - K) // stride + 1
    assert out.shape == (N, Cout, Ho, Wo)
    assert jnp.allclose(out, ref, atol=1e-4, rtol=1e-4)

    print("KERNEL_OK")
</pallas_src>

<mosaic_0001>
module attributes {stable_mosaic.version = 11 : i64} {
  func.func @kernel(%arg0: i32, %arg1: i32, %arg2: memref<1x9x9x4xf32, #tpu.memory_space<vmem>>, %arg3: memref<1x9x9x4xf32, #tpu.memory_space<vmem>>, %arg4: memref<1x9x9x4xf32, #tpu.memory_space<vmem>>, %arg5: memref<1x9x9x4xf32, #tpu.memory_space<vmem>>, %arg6: memref<9x8x4xf32, #tpu.memory_space<vmem>>, %arg7: memref<8x1xf32, #tpu.memory_space<vmem>>, %arg8: memref<1x8x64xf32, #tpu.memory_space<vmem>>) attributes {dimension_semantics = [#tpu.dimension_semantics<parallel>, #tpu.dimension_semantics<parallel>], iteration_bounds = array<i64: 2, 1>, scalar_prefetch = 0 : i64, scratch_operands = 0 : i64, tpu.core_type = #tpu.core_type<tc>, window_params = [{transform_indices = @transform_0, window_bounds = array<i64: 1, 9, 9, 4>}, {transform_indices = @transform_1, window_bounds = array<i64: 1, 9, 9, 4>}, {transform_indices = @transform_2, window_bounds = array<i64: 1, 9, 9, 4>}, {transform_indices = @transform_3, window_bounds = array<i64: 1, 9, 9, 4>}, {pipeline_mode = #tpu.pipeline_mode<synchronous>, transform_indices = @transform_4, window_bounds = array<i64: 9, 8, 4>}, {pipeline_mode = #tpu.pipeline_mode<synchronous>, transform_indices = @transform_5, window_bounds = array<i64: 8, 1>}, {transform_indices = @transform_6, window_bounds = array<i64: 1, 8, 64>}]} {
    %c8_i32 = arith.constant 8 : i32
    %0 = arith.muli %arg1, %c8_i32 : i32
    %cst = arith.constant 0.000000e+00 : f32
    %1 = vector.broadcast %cst : f32 to vector<8x64xf32>
    %c0_i32 = arith.constant 0 : i32
    %2 = arith.addi %0, %c0_i32 : i32
    %c0 = arith.constant 0 : index
    %3 = arith.index_cast %2 : i32 to index
    %c0_0 = arith.constant 0 : index
    %c0_1 = arith.constant 0 : index
    %4 = vector.load %arg2[%c0, %3, %c0_0, %c0_1] : memref<1x9x9x4xf32, #tpu.memory_space<vmem>>, vector<1x8x8x4xf32>
    %5 = vector.shape_cast %4 : vector<1x8x8x4xf32> to vector<8x8x4xf32>
    %6 = vector.shape_cast %5 : vector<8x8x4xf32> to vector<64x4xf32>
    %c0_2 = arith.constant 0 : index
    %c0_3 = arith.constant 0 : index
    %c0_4 = arith.constant 0 : index
    %7 = vector.load %arg6[%c0_2, %c0_3, %c0_4] : memref<9x8x4xf32, #tpu.memory_space<vmem>>, vector<1x8x4xf32>
    %8 = vector.shape_cast %7 : vector<1x8x4xf32> to vector<8x4xf32>
    %cst_5 = arith.constant dense<0.000000e+00> : vector<8x64xf32>
    %9 = tpu.matmul %8, %6, %cst_5 {dimension_numbers = #tpu.dot_dimension_numbers<[1], [1], [0], [0], [0, 0, 1, 0], [], []>} : vector<8x4xf32>, vector<64x4xf32>, vector<8x64xf32> -> vector<8x64xf32>
    %10 = arith.addf %1, %9 : vector<8x64xf32>
    %c0_i32_6 = arith.constant 0 : i32
    %11 = arith.addi %0, %c0_i32_6 : i32
    %c0_7 = arith.constant 0 : index
    %12 = arith.index_cast %11 : i32 to index
    %c0_8 = arith.constant 0 : index
    %c0_9 = arith.constant 0 : index
    %13 = vector.load %arg3[%c0_7, %12, %c0_8, %c0_9] : memref<1x9x9x4xf32, #tpu.memory_space<vmem>>, vector<1x8x8x4xf32>
    %14 = vector.shape_cast %13 : vector<1x8x8x4xf32> to vector<8x8x4xf32>
    %15 = vector.shape_cast %14 : vector<8x8x4xf32> to vector<64x4xf32>
    %c1 = arith.constant 1 : index
    %c0_10 = arith.constant 0 : index
    %c0_11 = arith.constant 0 : index
    %16 = vector.load %arg6[%c1, %c0_10, %c0_11] : memref<9x8x4xf32, #tpu.memory_space<vmem>>, vector<1x8x4xf32>
    %17 = vector.shape_cast %16 : vector<1x8x4xf32> to vector<8x4xf32>
    %cst_12 = arith.constant dense<0.000000e+00> : vector<8x64xf32>
    %18 = tpu.matmul %17, %15, %cst_12 {dimension_numbers = #tpu.dot_dimension_numbers<[1], [1], [0], [0], [0, 0, 1, 0], [], []>} : vector<8x4xf32>, vector<64x4xf32>, vector<8x64xf32> -> vector<8x64xf32>
    %19 = arith.addf %10, %18 : vector<8x64xf32>
    %c0_i32_13 = arith.constant 0 : i32
    %20 = arith.addi %0, %c0_i32_13 : i32
    %c0_14 = arith.constant 0 : index
    %21 = arith.index_cast %20 : i32 to index
    %c1_15 = arith.constant 1 : index
    %c0_16 = arith.constant 0 : index
    %22 = vector.load %arg2[%c0_14, %21, %c1_15, %c0_16] : memref<1x9x9x4xf32, #tpu.memory_space<vmem>>, vector<1x8x8x4xf32>
    %23 = vector.shape_cast %22 : vector<1x8x8x4xf32> to vector<8x8x4xf32>
    %24 = vector.shape_cast %23 : vector<8x8x4xf32> to vector<64x4xf32>
    %c2 = arith.constant 2 : index
    %c0_17 = arith.constant 0 : index
    %c0_18 = arith.constant 0 : index
    %25 = vector.load %arg6[%c2, %c0_17, %c0_18] : memref<9x8x4xf32, #tpu.memory_space<vmem>>, vector<1x8x4xf32>
    %26 = vector.shape_cast %25 : vector<1x8x4xf32> to vector<8x4xf32>
    %cst_19 = arith.constant dense<0.000000e+00> : vector<8x64xf32>
    %27 = tpu.matmul %26, %24, %cst_19 {dimension_numbers = #tpu.dot_dimension_numbers<[1], [1], [0], [0], [0, 0, 1, 0], [], []>} : vector<8x4xf32>, vector<64x4xf32>, vector<8x64xf32> -> vector<8x64xf32>
    %28 = arith.addf %19, %27 : vector<8x64xf32>
    %c0_i32_20 = arith.constant 0 : i32
    %29 = arith.addi %0, %c0_i32_20 : i32
    %c0_21 = arith.constant 0 : index
    %30 = arith.index_cast %29 : i32 to index
    %c0_22 = arith.constant 0 : index
    %c0_23 = arith.constant 0 : index
    %31 = vector.load %arg4[%c0_21, %30, %c0_22, %c0_23] : memref<1x9x9x4xf32, #tpu.memory_space<vmem>>, vector<1x8x8x4xf32>
    %32 = vector.shape_cast %31 : vector<1x8x8x4xf32> to vector<8x8x4xf32>
    %33 = vector.shape_cast %32 : vector<8x8x4xf32> to vector<64x4xf32>
    %c3 = arith.constant 3 : index
    %c0_24 = arith.constant 0 : index
    %c0_25 = arith.constant 0 : index
    %34 = vector.load %arg6[%c3, %c0_24, %c0_25] : memref<9x8x4xf32, #tpu.memory_space<vmem>>, vector<1x8x4xf32>
    %35 = vector.shape_cast %34 : vector<1x8x4xf32> to vector<8x4xf32>
    %cst_26 = arith.constant dense<0.000000e+00> : vector<8x64xf32>
    %36 = tpu.matmul %35, %33, %cst_26 {dimension_numbers = #tpu.dot_dimension_numbers<[1], [1], [0], [0], [0, 0, 1, 0], [], []>} : vector<8x4xf32>, vector<64x4xf32>, vector<8x64xf32> -> vector<8x64xf32>
    %37 = arith.addf %28, %36 : vector<8x64xf32>
    %c0_i32_27 = arith.constant 0 : i32
    %38 = arith.addi %0, %c0_i32_27 : i32
    %c0_28 = arith.constant 0 : index
    %39 = arith.index_cast %38 : i32 to index
    %c0_29 = arith.constant 0 : index
    %c0_30 = arith.constant 0 : index
    %40 = vector.load %arg5[%c0_28, %39, %c0_29, %c0_30] : memref<1x9x9x4xf32, #tpu.memory_space<vmem>>, vector<1x8x8x4xf32>
    %41 = vector.shape_cast %40 : vector<1x8x8x4xf32> to vector<8x8x4xf32>
    %42 = vector.shape_cast %41 : vector<8x8x4xf32> to vector<64x4xf32>
    %c4 = arith.constant 4 : index
    %c0_31 = arith.constant 0 : index
    %c0_32 = arith.constant 0 : index
    %43 = vector.load %arg6[%c4, %c0_31, %c0_32] : memref<9x8x4xf32, #tpu.memory_space<vmem>>, vector<1x8x4xf32>
    %44 = vector.shape_cast %43 : vector<1x8x4xf32> to vector<8x4xf32>
    %cst_33 = arith.constant dense<0.000000e+00> : vector<8x64xf32>
    %45 = tpu.matmul %44, %42, %cst_33 {dimension_numbers = #tpu.dot_dimension_numbers<[1], [1], [0], [0], [0, 0, 1, 0], [], []>} : vector<8x4xf32>, vector<64x4xf32>, vector<8x64xf32> -> vector<8x64xf32>
    %46 = arith.addf %37, %45 : vector<8x64xf32>
    %c0_i32_34 = arith.constant 0 : i32
    %47 = arith.addi %0, %c0_i32_34 : i32
    %c0_35 = arith.constant 0 : index
    %48 = arith.index_cast %47 : i32 to index
    %c1_36 = arith.constant 1 : index
    %c0_37 = arith.constant 0 : index
    %49 = vector.load %arg4[%c0_35, %48, %c1_36, %c0_37] : memref<1x9x9x4xf32, #tpu.memory_space<vmem>>, vector<1x8x8x4xf32>
    %50 = vector.shape_cast %49 : vector<1x8x8x4xf32> to vector<8x8x4xf32>
    %51 = vector.shape_cast %50 : vector<8x8x4xf32> to vector<64x4xf32>
    %c5 = arith.constant 5 : index
    %c0_38 = arith.constant 0 : index
    %c0_39 = arith.constant 0 : index
    %52 = vector.load %arg6[%c5, %c0_38, %c0_39] : memref<9x8x4xf32, #tpu.memory_space<vmem>>, vector<1x8x4xf32>
    %53 = vector.shape_cast %52 : vector<1x8x4xf32> to vector<8x4xf32>
    %cst_40 = arith.constant dense<0.000000e+00> : vector<8x64xf32>
    %54 = tpu.matmul %53, %51, %cst_40 {dimension_numbers = #tpu.dot_dimension_numbers<[1], [1], [0], [0], [0, 0, 1, 0], [], []>} : vector<8x4xf32>, vector<64x4xf32>, vector<8x64xf32> -> vector<8x64xf32>
    %55 = arith.addf %46, %54 : vector<8x64xf32>
    %c1_i32 = arith.constant 1 : i32
    %56 = arith.addi %0, %c1_i32 : i32
    %c0_41 = arith.constant 0 : index
    %57 = arith.index_cast %56 : i32 to index
    %c0_42 = arith.constant 0 : index
    %c0_43 = arith.constant 0 : index
    %58 = vector.load %arg2[%c0_41, %57, %c0_42, %c0_43] : memref<1x9x9x4xf32, #tpu.memory_space<vmem>>, vector<1x8x8x4xf32>
    %59 = vector.shape_cast %58 : vector<1x8x8x4xf32> to vector<8x8x4xf32>
    %60 = vector.shape_cast %59 : vector<8x8x4xf32> to vector<64x4xf32>
    %c6 = arith.constant 6 : index
    %c0_44 = arith.constant 0 : index
    %c0_45 = arith.constant 0 : index
    %61 = vector.load %arg6[%c6, %c0_44, %c0_45] : memref<9x8x4xf32, #tpu.memory_space<vmem>>, vector<1x8x4xf32>
    %62 = vector.shape_cast %61 : vector<1x8x4xf32> to vector<8x4xf32>
    %cst_46 = arith.constant dense<0.000000e+00> : vector<8x64xf32>
    %63 = tpu.matmul %62, %60, %cst_46 {dimension_numbers = #tpu.dot_dimension_numbers<[1], [1], [0], [0], [0, 0, 1, 0], [], []>} : vector<8x4xf32>, vector<64x4xf32>, vector<8x64xf32> -> vector<8x64xf32>
    %64 = arith.addf %55, %63 : vector<8x64xf32>
    %c1_i32_47 = arith.constant 1 : i32
    %65 = arith.addi %0, %c1_i32_47 : i32
    %c0_48 = arith.constant 0 : index
    %66 = arith.index_cast %65 : i32 to index
    %c0_49 = arith.constant 0 : index
    %c0_50 = arith.constant 0 : index
    %67 = vector.load %arg3[%c0_48, %66, %c0_49, %c0_50] : memref<1x9x9x4xf32, #tpu.memory_space<vmem>>, vector<1x8x8x4xf32>
    %68 = vector.shape_cast %67 : vector<1x8x8x4xf32> to vector<8x8x4xf32>
    %69 = vector.shape_cast %68 : vector<8x8x4xf32> to vector<64x4xf32>
    %c7 = arith.constant 7 : index
    %c0_51 = arith.constant 0 : index
    %c0_52 = arith.constant 0 : index
    %70 = vector.load %arg6[%c7, %c0_51, %c0_52] : memref<9x8x4xf32, #tpu.memory_space<vmem>>, vector<1x8x4xf32>
    %71 = vector.shape_cast %70 : vector<1x8x4xf32> to vector<8x4xf32>
    %cst_53 = arith.constant dense<0.000000e+00> : vector<8x64xf32>
    %72 = tpu.matmul %71, %69, %cst_53 {dimension_numbers = #tpu.dot_dimension_numbers<[1], [1], [0], [0], [0, 0, 1, 0], [], []>} : vector<8x4xf32>, vector<64x4xf32>, vector<8x64xf32> -> vector<8x64xf32>
    %73 = arith.addf %64, %72 : vector<8x64xf32>
    %c1_i32_54 = arith.constant 1 : i32
    %74 = arith.addi %0, %c1_i32_54 : i32
    %c0_55 = arith.constant 0 : index
    %75 = arith.index_cast %74 : i32 to index
    %c1_56 = arith.constant 1 : index
    %c0_57 = arith.constant 0 : index
    %76 = vector.load %arg2[%c0_55, %75, %c1_56, %c0_57] : memref<1x9x9x4xf32, #tpu.memory_space<vmem>>, vector<1x8x8x4xf32>
    %77 = vector.shape_cast %76 : vector<1x8x8x4xf32> to vector<8x8x4xf32>
    %78 = vector.shape_cast %77 : vector<8x8x4xf32> to vector<64x4xf32>
    %c8 = arith.constant 8 : index
    %c0_58 = arith.constant 0 : index
    %c0_59 = arith.constant 0 : index
    %79 = vector.load %arg6[%c8, %c0_58, %c0_59] : memref<9x8x4xf32, #tpu.memory_space<vmem>>, vector<1x8x4xf32>
    %80 = vector.shape_cast %79 : vector<1x8x4xf32> to vector<8x4xf32>
    %cst_60 = arith.constant dense<0.000000e+00> : vector<8x64xf32>
    %81 = tpu.matmul %80, %78, %cst_60 {dimension_numbers = #tpu.dot_dimension_numbers<[1], [1], [0], [0], [0, 0, 1, 0], [], []>} : vector<8x4xf32>, vector<64x4xf32>, vector<8x64xf32> -> vector<8x64xf32>
    %82 = arith.addf %73, %81 : vector<8x64xf32>
    %c0_61 = arith.constant 0 : index
    %c0_62 = arith.constant 0 : index
    %83 = vector.load %arg7[%c0_61, %c0_62] : memref<8x1xf32, #tpu.memory_space<vmem>>, vector<8x1xf32>
    %84 = vector.broadcast %83 : vector<8x1xf32> to vector<8x64xf32>
    %85 = arith.addf %82, %84 : vector<8x64xf32>
    %cst_63 = arith.constant 0.000000e+00 : f32
    %86 = vector.broadcast %cst_63 : f32 to vector<8x64xf32>
    %87 = arith.cmpf ogt, %85, %86 : vector<8x64xf32>
    %cst_64 = arith.constant 0.00999999977 : f32
    %88 = vector.broadcast %cst_64 : f32 to vector<8x64xf32>
    %89 = arith.mulf %88, %85 : vector<8x64xf32>
    %90 = arith.select %87, %85, %89 : vector<8x64xi1>, vector<8x64xf32>
    %c0_65 = arith.constant 0 : index
    %c0_66 = arith.constant 0 : index
    %c0_67 = arith.constant 0 : index
    %91 = vector.load %arg8[%c0_65, %c0_66, %c0_67] : memref<1x8x64xf32, #tpu.memory_space<vmem>>, vector<1x8x64xf32>
    %92 = vector.shape_cast %91 : vector<1x8x64xf32> to vector<8x64xf32>
    %93 = vector.shape_cast %90 : vector<8x64xf32> to vector<1x8x64xf32>
    tpu.vector_store %arg8[%c0_65, %c0_66, %c0_67], %93 {strides = array<i32>} : memref<1x8x64xf32, #tpu.memory_space<vmem>>, vector<1x8x64xf32>,
    return
  }
  func.func @transform_0(%arg0: i32, %arg1: i32) -> (i32, i32, i32, i32) {
    %c0_i32 = arith.constant 0 : i32
    %c0_i32_0 = arith.constant 0 : i32
    %c0_i32_1 = arith.constant 0 : i32
    %c0_i32_2 = arith.constant 0 : i32
    return %arg0, %c0_i32, %c0_i32_0, %c0_i32_1 : i32, i32, i32, i32
  }
  func.func @transform_1(%arg0: i32, %arg1: i32) -> (i32, i32, i32, i32) {
    %c0_i32 = arith.constant 0 : i32
    %c0_i32_0 = arith.constant 0 : i32
    %c0_i32_1 = arith.constant 0 : i32
    %c0_i32_2 = arith.constant 0 : i32
    return %arg0, %c0_i32, %c0_i32_0, %c0_i32_1 : i32, i32, i32, i32
  }
  func.func @transform_2(%arg0: i32, %arg1: i32) -> (i32, i32, i32, i32) {
    %c0_i32 = arith.constant 0 : i32
    %c0_i32_0 = arith.constant 0 : i32
    %c0_i32_1 = arith.constant 0 : i32
    %c0_i32_2 = arith.constant 0 : i32
    return %arg0, %c0_i32, %c0_i32_0, %c0_i32_1 : i32, i32, i32, i32
  }
  func.func @transform_3(%arg0: i32, %arg1: i32) -> (i32, i32, i32, i32) {
    %c0_i32 = arith.constant 0 : i32
    %c0_i32_0 = arith.constant 0 : i32
    %c0_i32_1 = arith.constant 0 : i32
    %c0_i32_2 = arith.constant 0 : i32
    return %arg0, %c0_i32, %c0_i32_0, %c0_i32_1 : i32, i32, i32, i32
  }
  func.func @transform_4(%arg0: i32, %arg1: i32) -> (i32, i32, i32) {
    %c0_i32 = arith.constant 0 : i32
    %c0_i32_0 = arith.constant 0 : i32
    %c0_i32_1 = arith.constant 0 : i32
    %c0_i32_2 = arith.constant 0 : i32
    return %c0_i32, %c0_i32_0, %c0_i32_1 : i32, i32, i32
  }
  func.func @transform_5(%arg0: i32, %arg1: i32) -> (i32, i32) {
    %c0_i32 = arith.constant 0 : i32
    %c0_i32_0 = arith.constant 0 : i32
    %c0_i32_1 = arith.constant 0 : i32
    return %c0_i32, %c0_i32_0 : i32, i32
  }
  func.func @transform_6(%arg0: i32, %arg1: i32) -> (i32, i32, i32) {
    %c0_i32 = arith.constant 0 : i32
    %c0_i32_0 = arith.constant 0 : i32
    return %arg0, %c0_i32, %arg1 : i32, i32, i32
  }
}

</mosaic_0001>

<llo_original>
// kernel: leaky_relu_conv2d.1
$region0: #{leaky_relu_conv2d.1}
  #allocation0 [shape = 'u32[]', space=smem, size = 0x4, offset = 0x4, fixed_abs, tag = 'smem constant byte address 0x4 - core index']
  #allocation1 [shape = 'u32[144,128]{1,0:T(1,128)}', space=vmem, size = 0x12000, scoped, tag = 'internal scratch']
  %s0 = inlined_call_operand.vmem [shape: f32[2,9,9,4], index: 0, kind: input, shape index: {}]
  %s1 = inlined_call_operand.vmem [shape: f32[2,9,9,4], index: 1, kind: input, shape index: {}]
  %s2 = inlined_call_operand.vmem [shape: f32[2,9,9,4], index: 2, kind: input, shape index: {}]
  %s3 = inlined_call_operand.vmem [shape: f32[2,9,9,4], index: 3, kind: input, shape index: {}]
  %s4 = inlined_call_operand.vmem [shape: f32[9,8,4], index: 4, kind: input, shape index: {}]
  %s5 = inlined_call_operand.vmem [shape: f32[8,1], index: 5, kind: input, shape index: {}]
  %s6 = inlined_call_operand.vmem [shape: f32[2,8,64], index: 6, kind: output, shape index: {}]
  %s7 = sld [smem:[#allocation0]]
  $region57: #{leaky_relu_conv2d.1} parent=0
    _
  %s9 = ssub.s32 1, %s7
  %s10 = scalar_select 0, %s9, %s7
  loop: start=0, step=1, limit=4
  $region2: #{leaky_relu_conv2d.1} parent=0 // loop_pre_header
    _
  $region3: #{leaky_relu_conv2d.1} parent=0 // loop_header
    %s12 = sphi 0, %s16
    %p13 = scmp.ge.s32.totalorder %s12, 4
    %s19 = sphi 0, %s31
    %s20 = sphi 0, %s27
    %s21 = sphi 0, %s19
    %s22 = sphi 0, %s20
    %s23 = sphi 0, %s21
    %s24 = sphi 0, %s22
    %s34 = sphi 0, %s36
    %s37 = sphi 0, %s34
    %s38 = sphi 0, %s37
    %s54 = sphi 0, %s38
    %s60 = sphi 0, %s62
    %s63 = sphi 0, %s60
    %s64 = sphi 0, %s63
    %s80 = sphi 0, %s64
    %s86 = sphi 0, %s88
    %s89 = sphi 0, %s86
    %s90 = sphi 0, %s89
    %s106 = sphi 0, %s90
    %s112 = sphi 0, %s114
    %s115 = sphi 0, %s112
    %s116 = sphi 0, %s115
    %s132 = sphi 0, %s116
    %s136 = sphi 0, %s136
    %s138 = sphi 0, %s136
    %s139 = sphi 0, %s138
    %s153 = sphi 0, %s139
    %s157 = sphi 0, %s157
    %s159 = sphi 0, %s157
    %s160 = sphi 0, %s159
    %s174 = sphi 0, %s160
    %s182 = sphi 0, %s184
    %s185 = sphi 0, %s182
    %s186 = sphi 0, %s185
    %s202 = sphi 0, %s186
  $region4: #{leaky_relu_conv2d.1} parent=0 // loop_header_branch
    %15 = sbr.rel (%p13) target = $region8
  $region5: #{leaky_relu_conv2d.1} parent=0 // loop_body
    %s17 = ssub.s32 %s12, 1
    %s18 = ssub.s32 %s12, 2
    %s25 = sadd.s32 1, %s20
    %p26 = scmp.ge.s32.totalorder %s25, 1
    %s27 = scalar_select %p26, 0, %s25
    %s28 = sadd.s32 1, %s19
    %s29 = scalar_select %p26, %s28, %s19
    %p30 = scmp.ge.s32.totalorder %s29, 2
    %s31 = scalar_select %p30, 0, %s29
    %s32 = ssub.s32 %s19, %s31
    %p33 = scmp.eq.s32.totalorder %s32, 0
    %s35 = sadd.s32 %s34, 1
    %s36 = scalar_select %p33, %s34, %s35
    %p39 = pneg %p33
    %p40 = scmp.eq.s32.totalorder %s12, 1
    %p41 = por %p39, %p40
    %p42 = scmp.ne.s32.totalorder %s34, %s37
    %p43 = scmp.eq.s32.totalorder %s12, 0
    %p44 = por %p42, %p43
    %p45 = scmp.ne.s32.totalorder %s34, %s37
    %p46 = scmp.eq.s32.totalorder %s17, 1
    %p47 = por %p45, %p46
    %p48 = scmp.ne.s32.totalorder %s37, %s38
    %p49 = scmp.eq.s32.totalorder %s17, 0
    %p50 = por %p48, %p49
    %p51 = scmp.ne.s32.totalorder %s37, %s38
    %p52 = scmp.eq.s32.totalorder %s18, 1
    %p53 = por %p51, %p52
    %p55 = scmp.ne.s32.totalorder %s38, %s54
    %p56 = scmp.eq.s32.totalorder %s18, 0
    %p57 = por %p55, %p56
    %s58 = ssub.s32 %s19, %s31
    %p59 = scmp.eq.s32.totalorder %s58, 0
    %s61 = sadd.s32 %s60, 1
    %s62 = scalar_select %p59, %s60, %s61
    %p65 = pneg %p59
    %p66 = scmp.eq.s32.totalorder %s12, 1
    %p67 = por %p65, %p66
    %p68 = scmp.ne.s32.totalorder %s60, %s63
    %p69 = scmp.eq.s32.totalorder %s12, 0
    %p70 = por %p68, %p69
    %p71 = scmp.ne.s32.totalorder %s60, %s63
    %p72 = scmp.eq.s32.totalorder %s17, 1
    %p73 = por %p71, %p72
    %p74 = scmp.ne.s32.totalorder %s63, %s64
    %p75 = scmp.eq.s32.totalorder %s17, 0
    %p76 = por %p74, %p75
    %p77 = scmp.ne.s32.totalorder %s63, %s64
    %p78 = scmp.eq.s32.totalorder %s18, 1
    %p79 = por %p77, %p78
    %p81 = scmp.ne.s32.totalorder %s64, %s80
    %p82 = scmp.eq.s32.totalorder %s18, 0
    %p83 = por %p81, %p82
    %s84 = ssub.s32 %s19, %s31
    %p85 = scmp.eq.s32.totalorder %s84, 0
    %s87 = sadd.s32 %s86, 1
    %s88 = scalar_select %p85, %s86, %s87
    %p91 = pneg %p85
    %p92 = scmp.eq.s32.totalorder %s12, 1
    %p93 = por %p91, %p92
    %p94 = scmp.ne.s32.totalorder %s86, %s89
    %p95 = scmp.eq.s32.totalorder %s12, 0
    %p96 = por %p94, %p95
    %p97 = scmp.ne.s32.totalorder %s86, %s89
    %p98 = scmp.eq.s32.totalorder %s17, 1
    %p99 = por %p97, %p98
    %p100 = scmp.ne.s32.totalorder %s89, %s90
    %p101 = scmp.eq.s32.totalorder %s17, 0
    %p102 = por %p100, %p101
    %p103 = scmp.ne.s32.totalorder %s89, %s90
    %p104 = scmp.eq.s32.totalorder %s18, 1
    %p105 = por %p103, %p104
    %p107 = scmp.ne.s32.totalorder %s90, %s106
    %p108 = scmp.eq.s32.totalorder %s18, 0
    %p109 = por %p107, %p108
    %s110 = ssub.s32 %s19, %s31
    %p111 = scmp.eq.s32.totalorder %s110, 0
    %s113 = sadd.s32 %s112, 1
    %s114 = scalar_select %p111, %s112, %s113
    %p117 = pneg %p111
    %p118 = scmp.eq.s32.totalorder %s12, 1
    %p119 = por %p117, %p118
    %p120 = scmp.ne.s32.totalorder %s112, %s115
    %p121 = scmp.eq.s32.totalorder %s12, 0
    %p122 = por %p120, %p121
    %p123 = scmp.ne.s32.totalorder %s112, %s115
    %p124 = scmp.eq.s32.totalorder %s17, 1
    %p125 = por %p123, %p124
    %p126 = scmp.ne.s32.totalorder %s115, %s116
    %p127 = scmp.eq.s32.totalorder %s17, 0
    %p128 = por %p126, %p127
    %p129 = scmp.ne.s32.totalorder %s115, %s116
    %p130 = scmp.eq.s32.totalorder %s18, 1
    %p131 = por %p129, %p130
    %p133 = scmp.ne.s32.totalorder %s116, %s132
    %p134 = scmp.eq.s32.totalorder %s18, 0
    %p135 = por %p133, %p134
    %s137 = sadd.s32 %s136, 1
    %p140 = scmp.eq.s32.totalorder %s12, 1
    %p141 = scmp.ne.s32.totalorder %s136, %s138
    %p142 = scmp.eq.s32.totalorder %s12, 0
    %p143 = por %p141, %p142
    %p144 = scmp.ne.s32.totalorder %s136, %s138
    %p145 = scmp.eq.s32.totalorder %s17, 1
    %p146 = por %p144, %p145
    %p147 = scmp.ne.s32.totalorder %s138, %s139
    %p148 = scmp.eq.s32.totalorder %s17, 0
    %p149 = por %p147, %p148
    %p150 = scmp.ne.s32.totalorder %s138, %s139
    %p151 = scmp.eq.s32.totalorder %s18, 1
    %p152 = por %p150, %p151
    %p154 = scmp.ne.s32.totalorder %s139, %s153
    %p155 = scmp.eq.s32.totalorder %s18, 0
    %p156 = por %p154, %p155
    %s158 = sadd.s32 %s157, 1
    %p161 = scmp.eq.s32.totalorder %s12, 1
    %p162 = scmp.ne.s32.totalorder %s157, %s159
    %p163 = scmp.eq.s32.totalorder %s12, 0
    %p164 = por %p162, %p163
    %p165 = scmp.ne.s32.totalorder %s157, %s159
    %p166 = scmp.eq.s32.totalorder %s17, 1
    %p167 = por %p165, %p166
    %p168 = scmp.ne.s32.totalorder %s159, %s160
    %p169 = scmp.eq.s32.totalorder %s17, 0
    %p170 = por %p168, %p169
    %p171 = scmp.ne.s32.totalorder %s159, %s160
    %p172 = scmp.eq.s32.totalorder %s18, 1
    %p173 = por %p171, %p172
    %p175 = scmp.ne.s32.totalorder %s160, %s174
    %p176 = scmp.eq.s32.totalorder %s18, 0
    %p177 = por %p175, %p176
    %s178 = ssub.s32 %s19, %s31
    %s179 = ssub.s32 %s20, %s27
    %s180 = sor.u32 %s178, %s179
    %p181 = scmp.eq.s32.totalorder %s180, 0
    %s183 = sadd.s32 %s182, 1
    %s184 = scalar_select %p181, %s182, %s183
    %p187 = pneg %p181
    %p188 = scmp.eq.s32.totalorder %s12, 1
    %p189 = por %p187, %p188
    %p190 = scmp.ne.s32.totalorder %s182, %s185
    %p191 = scmp.eq.s32.totalorder %s12, 0
    %p192 = por %p190, %p191
    %p193 = scmp.ne.s32.totalorder %s182, %s185
    %p194 = scmp.eq.s32.totalorder %s17, 1
    %p195 = por %p193, %p194
    %p196 = scmp.ne.s32.totalorder %s185, %s186
    %p197 = scmp.eq.s32.totalorder %s17, 0
    %p198 = por %p196, %p197
    %p199 = scmp.ne.s32.totalorder %s185, %s186
    %p200 = scmp.eq.s32.totalorder %s18, 1
    %p201 = por %p199, %p200
    %p203 = scmp.ne.s32.totalorder %s186, %s202
    %p204 = scmp.eq.s32.totalorder %s18, 0
    %p205 = por %p203, %p204
    %p206 = scmp.le.s32.totalorder 1, %s12
    %p207 = scmp.lt.s32.totalorder %s12, 3
    %p208 = pnand %p206, %p207
    %p209 = pneg %p208
    // Predicated region
    $region9: #{leaky_relu_conv2d.1} parent=5 // pred_check
      _
    $region10: #{leaky_relu_conv2d.1} parent=5 // pred_check_branch
      %211 = sbr.rel (%p208) target = $region12
    $region11: #{leaky_relu_conv2d.1} parent=5 // pred_region
      %s212 = ssub.s32 %s12, 1
      // Predicated region
      $region13: #{leaky_relu_conv2d.1} parent=11 // pred_check
        %p213 = pneg %p149
      $region14: #{leaky_relu_conv2d.1} parent=11 // pred_check_branch
        %215 = sbr.rel (%p213) target = $region16
      $region15: #{leaky_relu_conv2d.1} parent=11 // pred_region
        _
      $region16: #{leaky_relu_conv2d.1} parent=11 // pred_fallthru
        _
      // Predicated region
      $region17: #{leaky_relu_conv2d.1} parent=11 // pred_check
        %p216 = pneg %p170
      $region18: #{leaky_relu_conv2d.1} parent=11 // pred_check_branch
        %218 = sbr.rel (%p216) target = $region20
      $region19: #{leaky_relu_conv2d.1} parent=11 // pred_region
        _
      $region20: #{leaky_relu_conv2d.1} parent=11 // pred_fallthru
        _
    $region12: #{leaky_relu_conv2d.1} parent=5 // pred_fallthru
      _
    %p219 = scmp.lt.s32.totalorder %s12, 2
    // Predicated region
    $region21: #{leaky_relu_conv2d.1} parent=5 // pred_check
      %p220 = pneg %p219
    $region22: #{leaky_relu_conv2d.1} parent=5 // pred_check_branch
      %222 = sbr.rel (%p220) target = $region24
    $region23: #{leaky_relu_conv2d.1} parent=5 // pred_region
      // Predicated region
      $region25: #{leaky_relu_conv2d.1} parent=23 // pred_check
        %p223 = pneg %p44
      $region26: #{leaky_relu_conv2d.1} parent=23 // pred_check_branch
        %225 = sbr.rel (%p223) target = $region28
      $region27: #{leaky_relu_conv2d.1} parent=23 // pred_region
        %p226 = scmp.lt.s32.totalorder %s19, 1
        %s227 = scalar_select %p226, %s19, 1
        %s228 = smul.addr %s227, 18
        %s229 = smul.addr %s228, 8
        %s230 = scalar_lea.vmem %s0, %s229
      $region28: #{leaky_relu_conv2d.1} parent=23 // pred_fallthru
        _
      // Predicated region
      $region29: #{leaky_relu_conv2d.1} parent=23 // pred_check
        %p231 = pneg %p70
      $region30: #{leaky_relu_conv2d.1} parent=23 // pred_check_branch
        %233 = sbr.rel (%p231) target = $region32
      $region31: #{leaky_relu_conv2d.1} parent=23 // pred_region
        %p234 = scmp.lt.s32.totalorder %s19, 1
        %s235 = scalar_select %p234, %s19, 1
        %s236 = smul.addr %s235, 18
        %s237 = smul.addr %s236, 8
        %s238 = scalar_lea.vmem %s1, %s237
      $region32: #{leaky_relu_conv2d.1} parent=23 // pred_fallthru
        _
      // Predicated region
      $region33: #{leaky_relu_conv2d.1} parent=23 // pred_check
        %p239 = pneg %p96
      $region34: #{leaky_relu_conv2d.1} parent=23 // pred_check_branch
        %241 = sbr.rel (%p239) target = $region36
      $region35: #{leaky_relu_conv2d.1} parent=23 // pred_region
        %p242 = scmp.lt.s32.totalorder %s19, 1
        %s243 = scalar_select %p242, %s19, 1
        %s244 = smul.addr %s243, 18
        %s245 = smul.addr %s244, 8
        %s246 = scalar_lea.vmem %s2, %s245
      $region36: #{leaky_relu_conv2d.1} parent=23 // pred_fallthru
        _
      // Predicated region
      $region37: #{leaky_relu_conv2d.1} parent=23 // pred_check
        %p247 = pneg %p122
      $region38: #{leaky_relu_conv2d.1} parent=23 // pred_check_branch
        %249 = sbr.rel (%p247) target = $region40
      $region39: #{leaky_relu_conv2d.1} parent=23 // pred_region
        %p250 = scmp.lt.s32.totalorder %s19, 1
        %s251 = scalar_select %p250, %s19, 1
        %s252 = smul.addr %s251, 18
        %s253 = smul.addr %s252, 8
        %s254 = scalar_lea.vmem %s3, %s253
      $region40: #{leaky_relu_conv2d.1} parent=23 // pred_fallthru
        _
    $region24: #{leaky_relu_conv2d.1} parent=5 // pred_fallthru
      _
    %p255 = scmp.le.s32.totalorder 1, %s12
    %p256 = scmp.lt.s32.totalorder %s12, 3
    %p257 = pnand %p255, %p256
    %p258 = pneg %p257
    // Predicated region
    $region41: #{leaky_relu_conv2d.1} parent=5 // pred_check
      _
    $region42: #{leaky_relu_conv2d.1} parent=5 // pred_check_branch
      %260 = sbr.rel (%p257) target = $region44
    $region43: #{leaky_relu_conv2d.1} parent=5 // pred_region
      %s261 = ssub.s32 %s12, 1
      %p262 = scmp.lt.s32.totalorder %s21, 1
      %s263 = scalar_select %p262, %s21, 1
      %s264 = smul.addr %s263, 18
      %s265 = smul.addr %s264, 8
      %s266 = scalar_lea.vmem %s0, %s265
      %p267 = pneg %p50
      %p268 = pneg %p47
      %p269 = scmp.lt.s32.totalorder %s21, 1
      %s270 = scalar_select %p269, %s21, 1
      %s271 = smul.addr %s270, 18
      %s272 = smul.addr %s271, 8
      %s273 = scalar_lea.vmem %s1, %s272
      %p274 = pneg %p76
      %p275 = pneg %p73
      %p276 = scmp.lt.s32.totalorder %s21, 1
      %s277 = scalar_select %p276, %s21, 1
      %s278 = smul.addr %s277, 18
      %s279 = smul.addr %s278, 8
      %s280 = scalar_lea.vmem %s2, %s279
      %p281 = pneg %p102
      %p282 = pneg %p99
      %p283 = scmp.lt.s32.totalorder %s21, 1
      %s284 = scalar_select %p283, %s21, 1
      %s285 = smul.addr %s284, 18
      %s286 = smul.addr %s285, 8
      %s287 = scalar_lea.vmem %s3, %s286
      %p288 = pneg %p128
      %p289 = pneg %p125
      %p290 = pneg %p149
      %p291 = pneg %p146
      %p292 = pneg %p170
      %p293 = pneg %p167
      %p294 = pneg %p198
      %p295 = pneg %p195
      %p296 = scmp.lt.s32.totalorder %s21, 1
      %s297 = scalar_select %p296, %s21, 1
      %p298 = scmp.lt.s32.totalorder %s22, 0
      %s299 = scalar_select %p298, %s22, 0
      %s300 = sadd.s32 %s299, %s297
      %s301 = smul.addr %s300, 8
      %s302 = scalar_lea.vmem %s6, %s301
      %p303 = scmp.lt.s32.totalorder %s21, 1
      %s304 = scalar_select %p303, %s21, 1
      %s305 = smul.addr %s304, 18
      %s306 = smul.addr %s305, 8
      %s307 = scalar_lea.vmem %s0, %s306
      %p308 = scmp.lt.s32.totalorder %s21, 1
      %s309 = scalar_select %p308, %s21, 1
      %s310 = smul.addr %s309, 18
      %s311 = smul.addr %s310, 8
      %s312 = scalar_lea.vmem %s1, %s311
      %p313 = scmp.lt.s32.totalorder %s21, 1
      %s314 = scalar_select %p313, %s21, 1
      %s315 = smul.addr %s314, 18
      %s316 = smul.addr %s315, 8
      %s317 = scalar_lea.vmem %s2, %s316
      %p318 = scmp.lt.s32.totalorder %s21, 1
      %s319 = scalar_select %p318, %s21, 1
      %s320 = smul.addr %s319, 18
      %s321 = smul.addr %s320, 8
      %s322 = scalar_lea.vmem %s3, %s321
      %p323 = scmp.lt.s32.totalorder %s21, 1
      %s324 = scalar_select %p323, %s21, 1
      %p325 = scmp.lt.s32.totalorder %s22, 0
      %s326 = scalar_select %p325, %s22, 0
      %s327 = sadd.s32 %s326, %s324
      %s328 = smul.addr %s327, 8
      %s329 = scalar_lea.vmem %s6, %s328
      %s330 = smul.u32 %s22, 8
      %s331 = smul.u32 %s330, 16
      %s332 = scalar_lea.vmem %s307, %s331
      %v333 = vld [vmem:[%s332] sm:$0xff]
      %v334 = vld [vmem:[%s332 + $0x10] sm:$0xff]
      %v335 = vld [vmem:[%s332 + $0x20] sm:$0xff]
      %v336 = vld [vmem:[%s332 + $0x30] sm:$0xff]
      %v337 = vld [vmem:[%s332 + $0x40] sm:$0xff]
      %v338 = vld [vmem:[%s332 + $0x50] sm:$0xff]
      %v339 = vld [vmem:[%s332 + $0x60] sm:$0xff]
      %v340 = vld [vmem:[%s332 + $0x70] sm:$0xff]
      %v341 = vld [vmem:[%s4] sm:$0xff]
      %s342 = scalar_lea.vmem %s312, %s331
      %v343 = vld [vmem:[%s342] sm:$0xff]
      %v344 = vld [vmem:[%s342 + $0x10] sm:$0xff]
      %v345 = vld [vmem:[%s342 + $0x20] sm:$0xff]
      %v346 = vld [vmem:[%s342 + $0x30] sm:$0xff]
      %v347 = vld [vmem:[%s342 + $0x40] sm:$0xff]
      %v348 = vld [vmem:[%s342 + $0x50] sm:$0xff]
      %v349 = vld [vmem:[%s342 + $0x60] sm:$0xff]
      %v350 = vld [vmem:[%s342 + $0x70] sm:$0xff]
      %s351 = scalar_lea.vmem %s4, 8
      %v352 = vld [vmem:[%s351] sm:$0xff]
      %vm353 = vcmask 31744
      %v355 = vsel %vm353, %v352, 0
      %v358 = vsel %vm353, %v343, 0
      %v361 = vsel %vm353, %v344, 0
      %v364 = vsel %vm353, %v345, 0
      %v367 = vsel %vm353, %v346, 0
      %v370 = vsel %vm353, %v347, 0
      %v373 = vsel %vm353, %v348, 0
      %v376 = vsel %vm353, %v349, 0
      %v379 = vsel %vm353, %v350, 0
      %381 = vmatprep.subr.mxu0 0.0
      %382 = vmatpush1.xpose.msra.mxu0 0.0
      %383 = vmatprep.subr.mxu0 0.0
      %384 = vmatpush1.xpose.msra.mxu0 0.0
      %385 = vmatprep.subr.mxu0 0.0
      %386 = vmatpush1.xpose.msra.mxu0 0.0
      %387 = vmatprep.subr.mxu0 0.0
      %388 = vmatpush1.xpose.msra.mxu0 0.0
      %389 = vmatprep.subr.mxu0 0.0
      %390 = vmatpush1.xpose.msra.mxu0 0.0
      %391 = vmatprep.subr.mxu0 0.0
      %392 = vmatpush1.xpose.msra.mxu0 0.0
      %393 = vmatprep.subr.mxu0 0.0
      %394 = vmatpush1.xpose.msra.mxu0 0.0
      %395 = vmatprep.subr.mxu0 0.0
      %396 = vmatpush1.xpose.msra.mxu0 0.0
      %397 = vmatprep.subr.mxu0 0.0
      %398 = vmatpush1.xpose.msra.mxu0 %v379
      %399 = vmatprep.subr.mxu0 0.0
      %400 = vmatpush1.xpose.msra.mxu0 %v376
      %401 = vmatprep.subr.mxu0 0.0
      %402 = vmatpush1.xpose.msra.mxu0 %v373
      %403 = vmatprep.subr.mxu0 0.0
      %404 = vmatpush1.xpose.msra.mxu0 %v370
      %405 = vmatprep.subr.mxu0 0.0
      %406 = vmatpush1.xpose.msra.mxu0 %v367
      %407 = vmatprep.subr.mxu0 0.0
      %408 = vmatpush1.xpose.msra.mxu0 %v364
      %409 = vmatprep.subr.mxu0 0.0
      %410 = vmatpush1.xpose.msra.mxu0 %v361
      %411 = vmatprep.subr.mxu0 0.0
      %412 = vmatpush1.xpose.msra.mxu0 %v358
      %413 = vmatprep.subr.mxu0 0.0
      %414 = vmatpush2.xpose.msra.mxu0 0.0
      %415 = vmatprep.subr.mxu0 0.0
      %416 = vmatpush2.xpose.msra.mxu0 0.0
      %417 = vmatprep.subr.mxu0 0.0
      %418 = vmatpush2.xpose.msra.mxu0 0.0
      %419 = vmatprep.subr.mxu0 0.0
      %420 = vmatpush2.xpose.msra.mxu0 0.0
      %421 = vmatprep.subr.mxu0 0.0
      %422 = vmatpush2.xpose.msra.mxu0 0.0
      %423 = vmatprep.subr.mxu0 0.0
      %424 = vmatpush2.xpose.msra.mxu0 0.0
      %425 = vmatprep.subr.mxu0 0.0
      %426 = vmatpush2.xpose.msra.mxu0 0.0
      %427 = vmatprep.subr.mxu0 0.0
      %428 = vmatpush2.xpose.msra.mxu0 0.0
      %429 = vmatprep.subr.mxu0 0.0
      %430 = vmatpush2.xpose.msra.mxu0 0.0
      %431 = vmatprep.subr.mxu0 0.0
      %432 = vmatpush2.xpose.msra.mxu0 0.0
      %433 = vmatprep.subr.mxu0 0.0
      %434 = vmatpush2.xpose.msra.mxu0 0.0
      %435 = vmatprep.subr.mxu0 0.0
      %436 = vmatpush2.xpose.msra.mxu0 0.0
      %437 = vmatprep.subr.mxu0 0.0
      %438 = vmatpush2.xpose.msra.mxu0 0.0
      %439 = vmatprep.subr.mxu0 0.0
      %440 = vmatpush2.xpose.msra.mxu0 0.0
      %441 = vmatprep.subr.mxu0 0.0
      %442 = vmatpush2.xpose.msra.mxu0 0.0
      %443 = vmatprep.subr.mxu0 0.0
      %444 = vmatpush2.xpose.msra.mxu0 0.0
      %445 = vmatprep.mubr.f32.mxu0 0.0
      %446 = vmatmul.mubr.f32.gmra.mxu0 %v355
      %v447 = vpop.f32.mrf.mxu0
      %v448 = vadd.f32 0.0, %v447
      %v449 = vpop.f32.mrf.mxu0
      %450 = vdwg.mxu0
      %v452 = vsel %vm353, %v341, 0
      %v455 = vsel %vm353, %v333, 0
      %v458 = vsel %vm353, %v334, 0
      %v461 = vsel %vm353, %v335, 0
      %v464 = vsel %vm353, %v336, 0
      %v467 = vsel %vm353, %v337, 0
      %v470 = vsel %vm353, %v338, 0
      %v473 = vsel %vm353, %v339, 0
      %v476 = vsel %vm353, %v340, 0
      %478 = vmatprep.subr.mxu0 0.0
      %479 = vmatpush1.xpose.msra.mxu0 0.0
      %480 = vmatprep.subr.mxu0 0.0
      %481 = vmatpush1.xpose.msra.mxu0 0.0
      %482 = vmatprep.subr.mxu0 0.0
      %483 = vmatpush1.xpose.msra.mxu0 0.0
      %484 = vmatprep.subr.mxu0 0.0
      %485 = vmatpush1.xpose.msra.mxu0 0.0
      %486 = vmatprep.subr.mxu0 0.0
      %487 = vmatpush1.xpose.msra.mxu0 0.0
      %488 = vmatprep.subr.mxu0 0.0
      %489 = vmatpush1.xpose.msra.mxu0 0.0
      %490 = vmatprep.subr.mxu0 0.0
      %491 = vmatpush1.xpose.msra.mxu0 0.0
      %492 = vmatprep.subr.mxu0 0.0
      %493 = vmatpush1.xpose.msra.mxu0 0.0
      %494 = vmatprep.subr.mxu0 0.0
      %495 = vmatpush1.xpose.msra.mxu0 %v476
      %496 = vmatprep.subr.mxu0 0.0
      %497 = vmatpush1.xpose.msra.mxu0 %v473
      %498 = vmatprep.subr.mxu0 0.0
      %499 = vmatpush1.xpose.msra.mxu0 %v470
      %500 = vmatprep.subr.mxu0 0.0
      %501 = vmatpush1.xpose.msra.mxu0 %v467
      %502 = vmatprep.subr.mxu0 0.0
      %503 = vmatpush1.xpose.msra.mxu0 %v464
      %504 = vmatprep.subr.mxu0 0.0
      %505 = vmatpush1.xpose.msra.mxu0 %v461
      %506 = vmatprep.subr.mxu0 0.0
      %507 = vmatpush1.xpose.msra.mxu0 %v458
      %508 = vmatprep.subr.mxu0 0.0
      %509 = vmatpush1.xpose.msra.mxu0 %v455
      %510 = vmatprep.subr.mxu0 0.0
      %511 = vmatpush2.xpose.msra.mxu0 0.0
      %512 = vmatprep.subr.mxu0 0.0
      %513 = vmatpush2.xpose.msra.mxu0 0.0
      %514 = vmatprep.subr.mxu0 0.0
      %515 = vmatpush2.xpose.msra.mxu0 0.0
      %516 = vmatprep.subr.mxu0 0.0
      %517 = vmatpush2.xpose.msra.mxu0 0.0
      %518 = vmatprep.subr.mxu0 0.0
      %519 = vmatpush2.xpose.msra.mxu0 0.0
      %520 = vmatprep.subr.mxu0 0.0
      %521 = vmatpush2.xpose.msra.mxu0 0.0
      %522 = vmatprep.subr.mxu0 0.0
      %523 = vmatpush2.xpose.msra.mxu0 0.0
      %524 = vmatprep.subr.mxu0 0.0
      %525 = vmatpush2.xpose.msra.mxu0 0.0
      %526 = vmatprep.subr.mxu0 0.0
      %527 = vmatpush2.xpose.msra.mxu0 0.0
      %528 = vmatprep.subr.mxu0 0.0
      %529 = vmatpush2.xpose.msra.mxu0 0.0
      %530 = vmatprep.subr.mxu0 0.0
      %531 = vmatpush2.xpose.msra.mxu0 0.0
      %532 = vmatprep.subr.mxu0 0.0
      %533 = vmatpush2.xpose.msra.mxu0 0.0
      %534 = vmatprep.subr.mxu0 0.0
      %535 = vmatpush2.xpose.msra.mxu0 0.0
      %536 = vmatprep.subr.mxu0 0.0
      %537 = vmatpush2.xpose.msra.mxu0 0.0
      %538 = vmatprep.subr.mxu0 0.0
      %539 = vmatpush2.xpose.msra.mxu0 0.0
      %540 = vmatprep.subr.mxu0 0.0
      %541 = vmatpush2.xpose.msra.mxu0 0.0
      %542 = vmatprep.mubr.f32.mxu0 0.0
      %543 = vmatmul.mubr.f32.gmra.mxu0 %v452
      %v544 = vpop.f32.mrf.mxu0
      %v545 = vadd.f32 %v448, %v544
      %v546 = vpop.f32.mrf.mxu0
      %547 = vdwg.mxu0
      %v548 = vld [vmem:[%s332 + $0x1] sm:$0xff]
      %v549 = vld [vmem:[%s332 + $0x11] sm:$0xff]
      %v550 = vld [vmem:[%s332 + $0x21] sm:$0xff]
      %v551 = vld [vmem:[%s332 + $0x31] sm:$0xff]
      %v552 = vld [vmem:[%s332 + $0x41] sm:$0xff]
      %v553 = vld [vmem:[%s332 + $0x51] sm:$0xff]
      %v554 = vld [vmem:[%s332 + $0x61] sm:$0xff]
      %v555 = vld [vmem:[%s332 + $0x71] sm:$0xff]
      %s556 = scalar_lea.vmem %s4, 16
      %v557 = vld [vmem:[%s556] sm:$0xff]
      %v559 = vsel %vm353, %v557, 0
      %v562 = vsel %vm353, %v548, 0
      %v565 = vsel %vm353, %v549, 0
      %v568 = vsel %vm353, %v550, 0
      %v571 = vsel %vm353, %v551, 0
      %v574 = vsel %vm353, %v552, 0
      %v577 = vsel %vm353, %v553, 0
      %v580 = vsel %vm353, %v554, 0
      %v583 = vsel %vm353, %v555, 0
      %585 = vmatprep.subr.mxu0 0.0
      %586 = vmatpush1.xpose.msra.mxu0 0.0
      %587 = vmatprep.subr.mxu0 0.0
      %588 = vmatpush1.xpose.msra.mxu0 0.0
      %589 = vmatprep.subr.mxu0 0.0
      %590 = vmatpush1.xpose.msra.mxu0 0.0
      %591 = vmatprep.subr.mxu0 0.0
      %592 = vmatpush1.xpose.msra.mxu0 0.0
      %593 = vmatprep.subr.mxu0 0.0
      %594 = vmatpush1.xpose.msra.mxu0 0.0
      %595 = vmatprep.subr.mxu0 0.0
      %596 = vmatpush1.xpose.msra.mxu0 0.0
      %597 = vmatprep.subr.mxu0 0.0
      %598 = vmatpush1.xpose.msra.mxu0 0.0
      %599 = vmatprep.subr.mxu0 0.0
      %600 = vmatpush1.xpose.msra.mxu0 0.0
      %601 = vmatprep.subr.mxu0 0.0
      %602 = vmatpush1.xpose.msra.mxu0 %v583
      %603 = vmatprep.subr.mxu0 0.0
      %604 = vmatpush1.xpose.msra.mxu0 %v580
      %605 = vmatprep.subr.mxu0 0.0
      %606 = vmatpush1.xpose.msra.mxu0 %v577
      %607 = vmatprep.subr.mxu0 0.0
      %608 = vmatpush1.xpose.msra.mxu0 %v574
      %609 = vmatprep.subr.mxu0 0.0
      %610 = vmatpush1.xpose.msra.mxu0 %v571
      %611 = vmatprep.subr.mxu0 0.0
      %612 = vmatpush1.xpose.msra.mxu0 %v568
      %613 = vmatprep.subr.mxu0 0.0
      %614 = vmatpush1.xpose.msra.mxu0 %v565
      %615 = vmatprep.subr.mxu0 0.0
      %616 = vmatpush1.xpose.msra.mxu0 %v562
      %617 = vmatprep.subr.mxu0 0.0
      %618 = vmatpush2.xpose.msra.mxu0 0.0
      %619 = vmatprep.subr.mxu0 0.0
      %620 = vmatpush2.xpose.msra.mxu0 0.0
      %621 = vmatprep.subr.mxu0 0.0
      %622 = vmatpush2.xpose.msra.mxu0 0.0
      %623 = vmatprep.subr.mxu0 0.0
      %624 = vmatpush2.xpose.msra.mxu0 0.0
      %625 = vmatprep.subr.mxu0 0.0
      %626 = vmatpush2.xpose.msra.mxu0 0.0
      %627 = vmatprep.subr.mxu0 0.0
      %628 = vmatpush2.xpose.msra.mxu0 0.0
      %629 = vmatprep.subr.mxu0 0.0
      %630 = vmatpush2.xpose.msra.mxu0 0.0
      %631 = vmatprep.subr.mxu0 0.0
      %632 = vmatpush2.xpose.msra.mxu0 0.0
      %633 = vmatprep.subr.mxu0 0.0
      %634 = vmatpush2.xpose.msra.mxu0 0.0
      %635 = vmatprep.subr.mxu0 0.0
      %636 = vmatpush2.xpose.msra.mxu0 0.0
      %637 = vmatprep.subr.mxu0 0.0
      %638 = vmatpush2.xpose.msra.mxu0 0.0
      %639 = vmatprep.subr.mxu0 0.0
      %640 = vmatpush2.xpose.msra.mxu0 0.0
      %641 = vmatprep.subr.mxu0 0.0
      %642 = vmatpush2.xpose.msra.mxu0 0.0
      %643 = vmatprep.subr.mxu0 0.0
      %644 = vmatpush2.xpose.msra.mxu0 0.0
      %645 = vmatprep.subr.mxu0 0.0
      %646 = vmatpush2.xpose.msra.mxu0 0.0
      %647 = vmatprep.subr.mxu0 0.0
      %648 = vmatpush2.xpose.msra.mxu0 0.0
      %649 = vmatprep.mubr.f32.mxu0 0.0
      %650 = vmatmul.mubr.f32.gmra.mxu0 %v559
      %v651 = vpop.f32.mrf.mxu0
      %v652 = vadd.f32 0.0, %v651
      %v653 = vpop.f32.mrf.mxu0
      %654 = vdwg.mxu0
      %v655 = vadd.f32 %v545, %v652
      %s656 = scalar_lea.vmem %s317, %s331
      %v657 = vld [vmem:[%s656] sm:$0xff]
      %v658 = vld [vmem:[%s656 + $0x10] sm:$0xff]
      %v659 = vld [vmem:[%s656 + $0x20] sm:$0xff]
      %v660 = vld [vmem:[%s656 + $0x30] sm:$0xff]
      %v661 = vld [vmem:[%s656 + $0x40] sm:$0xff]
      %v662 = vld [vmem:[%s656 + $0x50] sm:$0xff]
      %v663 = vld [vmem:[%s656 + $0x60] sm:$0xff]
      %v664 = vld [vmem:[%s656 + $0x70] sm:$0xff]
      %s665 = scalar_lea.vmem %s4, 24
      %v666 = vld [vmem:[%s665] sm:$0xff]
      %v668 = vsel %vm353, %v666, 0
      %v671 = vsel %vm353, %v657, 0
      %v674 = vsel %vm353, %v658, 0
      %v677 = vsel %vm353, %v659, 0
      %v680 = vsel %vm353, %v660, 0
      %v683 = vsel %vm353, %v661, 0
      %v686 = vsel %vm353, %v662, 0
      %v689 = vsel %vm353, %v663, 0
      %v692 = vsel %vm353, %v664, 0
      %694 = vmatprep.subr.mxu0 0.0
      %695 = vmatpush1.xpose.msra.mxu0 0.0
      %696 = vmatprep.subr.mxu0 0.0
      %697 = vmatpush1.xpose.msra.mxu0 0.0
      %698 = vmatprep.subr.mxu0 0.0
      %699 = vmatpush1.xpose.msra.mxu0 0.0
      %700 = vmatprep.subr.mxu0 0.0
      %701 = vmatpush1.xpose.msra.mxu0 0.0
      %702 = vmatprep.subr.mxu0 0.0
      %703 = vmatpush1.xpose.msra.mxu0 0.0
      %704 = vmatprep.subr.mxu0 0.0
      %705 = vmatpush1.xpose.msra.mxu0 0.0
      %706 = vmatprep.subr.mxu0 0.0
      %707 = vmatpush1.xpose.msra.mxu0 0.0
      %708 = vmatprep.subr.mxu0 0.0
      %709 = vmatpush1.xpose.msra.mxu0 0.0
      %710 = vmatprep.subr.mxu0 0.0
      %711 = vmatpush1.xpose.msra.mxu0 %v692
      %712 = vmatprep.subr.mxu0 0.0
      %713 = vmatpush1.xpose.msra.mxu0 %v689
      %714 = vmatprep.subr.mxu0 0.0
      %715 = vmatpush1.xpose.msra.mxu0 %v686
      %716 = vmatprep.subr.mxu0 0.0
      %717 = vmatpush1.xpose.msra.mxu0 %v683
      %718 = vmatprep.subr.mxu0 0.0
      %719 = vmatpush1.xpose.msra.mxu0 %v680
      %720 = vmatprep.subr.mxu0 0.0
      %721 = vmatpush1.xpose.msra.mxu0 %v677
      %722 = vmatprep.subr.mxu0 0.0
      %723 = vmatpush1.xpose.msra.mxu0 %v674
      %724 = vmatprep.subr.mxu0 0.0
      %725 = vmatpush1.xpose.msra.mxu0 %v671
      %726 = vmatprep.subr.mxu0 0.0
      %727 = vmatpush2.xpose.msra.mxu0 0.0
      %728 = vmatprep.subr.mxu0 0.0
      %729 = vmatpush2.xpose.msra.mxu0 0.0
      %730 = vmatprep.subr.mxu0 0.0
      %731 = vmatpush2.xpose.msra.mxu0 0.0
      %732 = vmatprep.subr.mxu0 0.0
      %733 = vmatpush2.xpose.msra.mxu0 0.0
      %734 = vmatprep.subr.mxu0 0.0
      %735 = vmatpush2.xpose.msra.mxu0 0.0
      %736 = vmatprep.subr.mxu0 0.0
      %737 = vmatpush2.xpose.msra.mxu0 0.0
      %738 = vmatprep.subr.mxu0 0.0
      %739 = vmatpush2.xpose.msra.mxu0 0.0
      %740 = vmatprep.subr.mxu0 0.0
      %741 = vmatpush2.xpose.msra.mxu0 0.0
      %742 = vmatprep.subr.mxu0 0.0
      %743 = vmatpush2.xpose.msra.mxu0 0.0
      %744 = vmatprep.subr.mxu0 0.0
      %745 = vmatpush2.xpose.msra.mxu0 0.0
      %746 = vmatprep.subr.mxu0 0.0
      %747 = vmatpush2.xpose.msra.mxu0 0.0
      %748 = vmatprep.subr.mxu0 0.0
      %749 = vmatpush2.xpose.msra.mxu0 0.0
      %750 = vmatprep.subr.mxu0 0.0
      %751 = vmatpush2.xpose.msra.mxu0 0.0
      %752 = vmatprep.subr.mxu0 0.0
      %753 = vmatpush2.xpose.msra.mxu0 0.0
      %754 = vmatprep.subr.mxu0 0.0
      %755 = vmatpush2.xpose.msra.mxu0 0.0
      %756 = vmatprep.subr.mxu0 0.0
      %757 = vmatpush2.xpose.msra.mxu0 0.0
      %758 = vmatprep.mubr.f32.mxu0 0.0
      %759 = vmatmul.mubr.f32.gmra.mxu0 %v668
      %v760 = vpop.f32.mrf.mxu0
      %v761 = vadd.f32 0.0, %v760
      %v762 = vpop.f32.mrf.mxu0
      %763 = vdwg.mxu0
      %v764 = vadd.f32 %v655, %v761
      %s765 = scalar_lea.vmem %s322, %s331
      %v766 = vld [vmem:[%s765] sm:$0xff]
      %v767 = vld [vmem:[%s765 + $0x10] sm:$0xff]
      %v768 = vld [vmem:[%s765 + $0x20] sm:$0xff]
      %v769 = vld [vmem:[%s765 + $0x30] sm:$0xff]
      %v770 = vld [vmem:[%s765 + $0x40] sm:$0xff]
      %v771 = vld [vmem:[%s765 + $0x50] sm:$0xff]
      %v772 = vld [vmem:[%s765 + $0x60] sm:$0xff]
      %v773 = vld [vmem:[%s765 + $0x70] sm:$0xff]
      %s774 = scalar_lea.vmem %s4, 32
      %v775 = vld [vmem:[%s774] sm:$0xff]
      %v777 = vsel %vm353, %v775, 0
      %v780 = vsel %vm353, %v766, 0
      %v783 = vsel %vm353, %v767, 0
      %v786 = vsel %vm353, %v768, 0
      %v789 = vsel %vm353, %v769, 0
      %v792 = vsel %vm353, %v770, 0
      %v795 = vsel %vm353, %v771, 0
      %v798 = vsel %vm353, %v772, 0
      %v801 = vsel %vm353, %v773, 0
      %803 = vmatprep.subr.mxu0 0.0
      %804 = vmatpush1.xpose.msra.mxu0 0.0
      %805 = vmatprep.subr.mxu0 0.0
      %806 = vmatpush1.xpose.msra.mxu0 0.0
      %807 = vmatprep.subr.mxu0 0.0
      %808 = vmatpush1.xpose.msra.mxu0 0.0
      %809 = vmatprep.subr.mxu0 0.0
      %810 = vmatpush1.xpose.msra.mxu0 0.0
      %811 = vmatprep.subr.mxu0 0.0
      %812 = vmatpush1.xpose.msra.mxu0 0.0
      %813 = vmatprep.subr.mxu0 0.0
      %814 = vmatpush1.xpose.msra.mxu0 0.0
      %815 = vmatprep.subr.mxu0 0.0
      %816 = vmatpush1.xpose.msra.mxu0 0.0
      %817 = vmatprep.subr.mxu0 0.0
      %818 = vmatpush1.xpose.msra.mxu0 0.0
      %819 = vmatprep.subr.mxu0 0.0
      %820 = vmatpush1.xpose.msra.mxu0 %v801
      %821 = vmatprep.subr.mxu0 0.0
      %822 = vmatpush1.xpose.msra.mxu0 %v798
      %823 = vmatprep.subr.mxu0 0.0
      %824 = vmatpush1.xpose.msra.mxu0 %v795
      %825 = vmatprep.subr.mxu0 0.0
      %826 = vmatpush1.xpose.msra.mxu0 %v792
      %827 = vmatprep.subr.mxu0 0.0
      %828 = vmatpush1.xpose.msra.mxu0 %v789
      %829 = vmatprep.subr.mxu0 0.0
      %830 = vmatpush1.xpose.msra.mxu0 %v786
      %831 = vmatprep.subr.mxu0 0.0
      %832 = vmatpush1.xpose.msra.mxu0 %v783
      %833 = vmatprep.subr.mxu0 0.0
      %834 = vmatpush1.xpose.msra.mxu0 %v780
      %835 = vmatprep.subr.mxu0 0.0
      %836 = vmatpush2.xpose.msra.mxu0 0.0
      %837 = vmatprep.subr.mxu0 0.0
      %838 = vmatpush2.xpose.msra.mxu0 0.0
      %839 = vmatprep.subr.mxu0 0.0
      %840 = vmatpush2.xpose.msra.mxu0 0.0
      %841 = vmatprep.subr.mxu0 0.0
      %842 = vmatpush2.xpose.msra.mxu0 0.0
      %843 = vmatprep.subr.mxu0 0.0
      %844 = vmatpush2.xpose.msra.mxu0 0.0
      %845 = vmatprep.subr.mxu0 0.0
      %846 = vmatpush2.xpose.msra.mxu0 0.0
      %847 = vmatprep.subr.mxu0 0.0
      %848 = vmatpush2.xpose.msra.mxu0 0.0
      %849 = vmatprep.subr.mxu0 0.0
      %850 = vmatpush2.xpose.msra.mxu0 0.0
      %851 = vmatprep.subr.mxu0 0.0
      %852 = vmatpush2.xpose.msra.mxu0 0.0
      %853 = vmatprep.subr.mxu0 0.0
      %854 = vmatpush2.xpose.msra.mxu0 0.0
      %855 = vmatprep.subr.mxu0 0.0
      %856 = vmatpush2.xpose.msra.mxu0 0.0
      %857 = vmatprep.subr.mxu0 0.0
      %858 = vmatpush2.xpose.msra.mxu0 0.0
      %859 = vmatprep.subr.mxu0 0.0
      %860 = vmatpush2.xpose.msra.mxu0 0.0
      %861 = vmatprep.subr.mxu0 0.0
      %862 = vmatpush2.xpose.msra.mxu0 0.0
      %863 = vmatprep.subr.mxu0 0.0
      %864 = vmatpush2.xpose.msra.mxu0 0.0
      %865 = vmatprep.subr.mxu0 0.0
      %866 = vmatpush2.xpose.msra.mxu0 0.0
      %867 = vmatprep.mubr.f32.mxu0 0.0
      %868 = vmatmul.mubr.f32.gmra.mxu0 %v777
      %v869 = vpop.f32.mrf.mxu0
      %v870 = vadd.f32 0.0, %v869
      %v871 = vpop.f32.mrf.mxu0
      %872 = vdwg.mxu0
      %v873 = vadd.f32 %v764, %v870
      %v874 = vld [vmem:[%s656 + $0x1] sm:$0xff]
      %v875 = vld [vmem:[%s656 + $0x11] sm:$0xff]
      %v876 = vld [vmem:[%s656 + $0x21] sm:$0xff]
      %v877 = vld [vmem:[%s656 + $0x31] sm:$0xff]
      %v878 = vld [vmem:[%s656 + $0x41] sm:$0xff]
      %v879 = vld [vmem:[%s656 + $0x51] sm:$0xff]
      %v880 = vld [vmem:[%s656 + $0x61] sm:$0xff]
      %v881 = vld [vmem:[%s656 + $0x71] sm:$0xff]
      %s882 = scalar_lea.vmem %s4, 40
      %v883 = vld [vmem:[%s882] sm:$0xff]
      %v885 = vsel %vm353, %v883, 0
      %v888 = vsel %vm353, %v874, 0
      %v891 = vsel %vm353, %v875, 0
      %v894 = vsel %vm353, %v876, 0
      %v897 = vsel %vm353, %v877, 0
      %v900 = vsel %vm353, %v878, 0
      %v903 = vsel %vm353, %v879, 0
      %v906 = vsel %vm353, %v880, 0
      %v909 = vsel %vm353, %v881, 0
      %911 = vmatprep.subr.mxu0 0.0
      %912 = vmatpush1.xpose.msra.mxu0 0.0
      %913 = vmatprep.subr.mxu0 0.0
      %914 = vmatpush1.xpose.msra.mxu0 0.0
      %915 = vmatprep.subr.mxu0 0.0
      %916 = vmatpush1.xpose.msra.mxu0 0.0
      %917 = vmatprep.subr.mxu0 0.0
      %918 = vmatpush1.xpose.msra.mxu0 0.0
      %919 = vmatprep.subr.mxu0 0.0
      %920 = vmatpush1.xpose.msra.mxu0 0.0
      %921 = vmatprep.subr.mxu0 0.0
      %922 = vmatpush1.xpose.msra.mxu0 0.0
      %923 = vmatprep.subr.mxu0 0.0
      %924 = vmatpush1.xpose.msra.mxu0 0.0
      %925 = vmatprep.subr.mxu0 0.0
      %926 = vmatpush1.xpose.msra.mxu0 0.0
      %927 = vmatprep.subr.mxu0 0.0
      %928 = vmatpush1.xpose.msra.mxu0 %v909
      %929 = vmatprep.subr.mxu0 0.0
      %930 = vmatpush1.xpose.msra.mxu0 %v906
      %931 = vmatprep.subr.mxu0 0.0
      %932 = vmatpush1.xpose.msra.mxu0 %v903
      %933 = vmatprep.subr.mxu0 0.0
      %934 = vmatpush1.xpose.msra.mxu0 %v900
      %935 = vmatprep.subr.mxu0 0.0
      %936 = vmatpush1.xpose.msra.mxu0 %v897
      %937 = vmatprep.subr.mxu0 0.0
      %938 = vmatpush1.xpose.msra.mxu0 %v894
      %939 = vmatprep.subr.mxu0 0.0
      %940 = vmatpush1.xpose.msra.mxu0 %v891
      %941 = vmatprep.subr.mxu0 0.0
      %942 = vmatpush1.xpose.msra.mxu0 %v888
      %943 = vmatprep.subr.mxu0 0.0
      %944 = vmatpush2.xpose.msra.mxu0 0.0
      %945 = vmatprep.subr.mxu0 0.0
      %946 = vmatpush2.xpose.msra.mxu0 0.0
      %947 = vmatprep.subr.mxu0 0.0
      %948 = vmatpush2.xpose.msra.mxu0 0.0
      %949 = vmatprep.subr.mxu0 0.0
      %950 = vmatpush2.xpose.msra.mxu0 0.0
      %951 = vmatprep.subr.mxu0 0.0
      %952 = vmatpush2.xpose.msra.mxu0 0.0
      %953 = vmatprep.subr.mxu0 0.0
      %954 = vmatpush2.xpose.msra.mxu0 0.0
      %955 = vmatprep.subr.mxu0 0.0
      %956 = vmatpush2.xpose.msra.mxu0 0.0
      %957 = vmatprep.subr.mxu0 0.0
      %958 = vmatpush2.xpose.msra.mxu0 0.0
      %959 = vmatprep.subr.mxu0 0.0
      %960 = vmatpush2.xpose.msra.mxu0 0.0
      %961 = vmatprep.subr.mxu0 0.0
      %962 = vmatpush2.xpose.msra.mxu0 0.0
      %963 = vmatprep.subr.mxu0 0.0
      %964 = vmatpush2.xpose.msra.mxu0 0.0
      %965 = vmatprep.subr.mxu0 0.0
      %966 = vmatpush2.xpose.msra.mxu0 0.0
      %967 = vmatprep.subr.mxu0 0.0
      %968 = vmatpush2.xpose.msra.mxu0 0.0
      %969 = vmatprep.subr.mxu0 0.0
      %970 = vmatpush2.xpose.msra.mxu0 0.0
      %971 = vmatprep.subr.mxu0 0.0
      %972 = vmatpush2.xpose.msra.mxu0 0.0
      %973 = vmatprep.subr.mxu0 0.0
      %974 = vmatpush2.xpose.msra.mxu0 0.0
      %975 = vmatprep.mubr.f32.mxu0 0.0
      %976 = vmatmul.mubr.f32.gmra.mxu0 %v885
      %v977 = vpop.f32.mrf.mxu0
      %v978 = vadd.f32 0.0, %v977
      %v979 = vpop.f32.mrf.mxu0
      %980 = vdwg.mxu0
      %v981 = vadd.f32 %v873, %v978
      %s982 = sadd.s32 %s330, 1
      %s983 = smul.u32 %s982, 16
      %s984 = scalar_lea.vmem %s307, %s983
      %v985 = vld [vmem:[%s984] sm:$0xff]
      %v986 = vld [vmem:[%s984 + $0x10] sm:$0xff]
      %v987 = vld [vmem:[%s984 + $0x20] sm:$0xff]
      %v988 = vld [vmem:[%s984 + $0x30] sm:$0xff]
      %v989 = vld [vmem:[%s984 + $0x40] sm:$0xff]
      %v990 = vld [vmem:[%s984 + $0x50] sm:$0xff]
      %v991 = vld [vmem:[%s984 + $0x60] sm:$0xff]
      %v992 = vld [vmem:[%s984 + $0x70] sm:$0xff]
      %s993 = scalar_lea.vmem %s4, 48
      %v994 = vld [vmem:[%s993] sm:$0xff]
      %v996 = vsel %vm353, %v994, 0
      %v999 = vsel %vm353, %v985, 0
      %v1002 = vsel %vm353, %v986, 0
      %v1005 = vsel %vm353, %v987, 0
      %v1008 = vsel %vm353, %v988, 0
      %v1011 = vsel %vm353, %v989, 0
      %v1014 = vsel %vm353, %v990, 0
      %v1017 = vsel %vm353, %v991, 0
      %v1020 = vsel %vm353, %v992, 0
      %1022 = vmatprep.subr.mxu0 0.0
      %1023 = vmatpush1.xpose.msra.mxu0 0.0
      %1024 = vmatprep.subr.mxu0 0.0
      %1025 = vmatpush1.xpose.msra.mxu0 0.0
      %1026 = vmatprep.subr.mxu0 0.0
      %1027 = vmatpush1.xpose.msra.mxu0 0.0
      %1028 = vmatprep.subr.mxu0 0.0
      %1029 = vmatpush1.xpose.msra.mxu0 0.0
      %1030 = vmatprep.subr.mxu0 0.0
      %1031 = vmatpush1.xpose.msra.mxu0 0.0
      %1032 = vmatprep.subr.mxu0 0.0
      %1033 = vmatpush1.xpose.msra.mxu0 0.0
      %1034 = vmatprep.subr.mxu0 0.0
      %1035 = vmatpush1.xpose.msra.mxu0 0.0
      %1036 = vmatprep.subr.mxu0 0.0
      %1037 = vmatpush1.xpose.msra.mxu0 0.0
      %1038 = vmatprep.subr.mxu0 0.0
      %1039 = vmatpush1.xpose.msra.mxu0 %v1020
      %1040 = vmatprep.subr.mxu0 0.0
      %1041 = vmatpush1.xpose.msra.mxu0 %v1017
      %1042 = vmatprep.subr.mxu0 0.0
      %1043 = vmatpush1.xpose.msra.mxu0 %v1014
      %1044 = vmatprep.subr.mxu0 0.0
      %1045 = vmatpush1.xpose.msra.mxu0 %v1011
      %1046 = vmatprep.subr.mxu0 0.0
      %1047 = vmatpush1.xpose.msra.mxu0 %v1008
      %1048 = vmatprep.subr.mxu0 0.0
      %1049 = vmatpush1.xpose.msra.mxu0 %v1005
      %1050 = vmatprep.subr.mxu0 0.0
      %1051 = vmatpush1.xpose.msra.mxu0 %v1002
      %1052 = vmatprep.subr.mxu0 0.0
      %1053 = vmatpush1.xpose.msra.mxu0 %v999
      %1054 = vmatprep.subr.mxu0 0.0
      %1055 = vmatpush2.xpose.msra.mxu0 0.0
      %1056 = vmatprep.subr.mxu0 0.0
      %1057 = vmatpush2.xpose.msra.mxu0 0.0
      %1058 = vmatprep.subr.mxu0 0.0
      %1059 = vmatpush2.xpose.msra.mxu0 0.0
      %1060 = vmatprep.subr.mxu0 0.0
      %1061 = vmatpush2.xpose.msra.mxu0 0.0
      %1062 = vmatprep.subr.mxu0 0.0
      %1063 = vmatpush2.xpose.msra.mxu0 0.0
      %1064 = vmatprep.subr.mxu0 0.0
      %1065 = vmatpush2.xpose.msra.mxu0 0.0
      %1066 = vmatprep.subr.mxu0 0.0
      %1067 = vmatpush2.xpose.msra.mxu0 0.0
      %1068 = vmatprep.subr.mxu0 0.0
      %1069 = vmatpush2.xpose.msra.mxu0 0.0
      %1070 = vmatprep.subr.mxu0 0.0
      %1071 = vmatpush2.xpose.msra.mxu0 0.0
      %1072 = vmatprep.subr.mxu0 0.0
      %1073 = vmatpush2.xpose.msra.mxu0 0.0
      %1074 = vmatprep.subr.mxu0 0.0
      %1075 = vmatpush2.xpose.msra.mxu0 0.0
      %1076 = vmatprep.subr.mxu0 0.0
      %1077 = vmatpush2.xpose.msra.mxu0 0.0
      %1078 = vmatprep.subr.mxu0 0.0
      %1079 = vmatpush2.xpose.msra.mxu0 0.0
      %1080 = vmatprep.subr.mxu0 0.0
      %1081 = vmatpush2.xpose.msra.mxu0 0.0
      %1082 = vmatprep.subr.mxu0 0.0
      %1083 = vmatpush2.xpose.msra.mxu0 0.0
      %1084 = vmatprep.subr.mxu0 0.0
      %1085 = vmatpush2.xpose.msra.mxu0 0.0
      %1086 = vmatprep.mubr.f32.mxu0 0.0
      %1087 = vmatmul.mubr.f32.gmra.mxu0 %v996
      %v1088 = vpop.f32.mrf.mxu0
      %v1089 = vadd.f32 0.0, %v1088
      %v1090 = vpop.f32.mrf.mxu0
      %1091 = vdwg.mxu0
      %v1092 = vadd.f32 %v981, %v1089
      %s1093 = scalar_lea.vmem %s312, %s983
      %v1094 = vld [vmem:[%s1093] sm:$0xff]
      %v1095 = vld [vmem:[%s1093 + $0x10] sm:$0xff]
      %v1096 = vld [vmem:[%s1093 + $0x20] sm:$0xff]
      %v1097 = vld [vmem:[%s1093 + $0x30] sm:$0xff]
      %v1098 = vld [vmem:[%s1093 + $0x40] sm:$0xff]
      %v1099 = vld [vmem:[%s1093 + $0x50] sm:$0xff]
      %v1100 = vld [vmem:[%s1093 + $0x60] sm:$0xff]
      %v1101 = vld [vmem:[%s1093 + $0x70] sm:$0xff]
      %s1102 = scalar_lea.vmem %s4, 56
      %v1103 = vld [vmem:[%s1102] sm:$0xff]
      %v1105 = vsel %vm353, %v1103, 0
      %v1108 = vsel %vm353, %v1094, 0
      %v1111 = vsel %vm353, %v1095, 0
      %v1114 = vsel %vm353, %v1096, 0
      %v1117 = vsel %vm353, %v1097, 0
      %v1120 = vsel %vm353, %v1098, 0
      %v1123 = vsel %vm353, %v1099, 0
      %v1126 = vsel %vm353, %v1100, 0
      %v1129 = vsel %vm353, %v1101, 0
      %1131 = vmatprep.subr.mxu0 0.0
      %1132 = vmatpush1.xpose.msra.mxu0 0.0
      %1133 = vmatprep.subr.mxu0 0.0
      %1134 = vmatpush1.xpose.msra.mxu0 0.0
      %1135 = vmatprep.subr.mxu0 0.0
      %1136 = vmatpush1.xpose.msra.mxu0 0.0
      %1137 = vmatprep.subr.mxu0 0.0
      %1138 = vmatpush1.xpose.msra.mxu0 0.0
      %1139 = vmatprep.subr.mxu0 0.0
      %1140 = vmatpush1.xpose.msra.mxu0 0.0
      %1141 = vmatprep.subr.mxu0 0.0
      %1142 = vmatpush1.xpose.msra.mxu0 0.0
      %1143 = vmatprep.subr.mxu0 0.0
      %1144 = vmatpush1.xpose.msra.mxu0 0.0
      %1145 = vmatprep.subr.mxu0 0.0
      %1146 = vmatpush1.xpose.msra.mxu0 0.0
      %1147 = vmatprep.subr.mxu0 0.0
      %1148 = vmatpush1.xpose.msra.mxu0 %v1129
      %1149 = vmatprep.subr.mxu0 0.0
      %1150 = vmatpush1.xpose.msra.mxu0 %v1126
      %1151 = vmatprep.subr.mxu0 0.0
      %1152 = vmatpush1.xpose.msra.mxu0 %v1123
      %1153 = vmatprep.subr.mxu0 0.0
      %1154 = vmatpush1.xpose.msra.mxu0 %v1120
      %1155 = vmatprep.subr.mxu0 0.0
      %1156 = vmatpush1.xpose.msra.mxu0 %v1117
      %1157 = vmatprep.subr.mxu0 0.0
      %1158 = vmatpush1.xpose.msra.mxu0 %v1114
      %1159 = vmatprep.subr.mxu0 0.0
      %1160 = vmatpush1.xpose.msra.mxu0 %v1111
      %1161 = vmatprep.subr.mxu0 0.0
      %1162 = vmatpush1.xpose.msra.mxu0 %v1108
      %1163 = vmatprep.subr.mxu0 0.0
      %1164 = vmatpush2.xpose.msra.mxu0 0.0
      %1165 = vmatprep.subr.mxu0 0.0
      %1166 = vmatpush2.xpose.msra.mxu0 0.0
      %1167 = vmatprep.subr.mxu0 0.0
      %1168 = vmatpush2.xpose.msra.mxu0 0.0
      %1169 = vmatprep.subr.mxu0 0.0
      %1170 = vmatpush2.xpose.msra.mxu0 0.0
      %1171 = vmatprep.subr.mxu0 0.0
      %1172 = vmatpush2.xpose.msra.mxu0 0.0
      %1173 = vmatprep.subr.mxu0 0.0
      %1174 = vmatpush2.xpose.msra.mxu0 0.0
      %1175 = vmatprep.subr.mxu0 0.0
      %1176 = vmatpush2.xpose.msra.mxu0 0.0
      %1177 = vmatprep.subr.mxu0 0.0
      %1178 = vmatpush2.xpose.msra.mxu0 0.0
      %1179 = vmatprep.subr.mxu0 0.0
      %1180 = vmatpush2.xpose.msra.mxu0 0.0
      %1181 = vmatprep.subr.mxu0 0.0
      %1182 = vmatpush2.xpose.msra.mxu0 0.0
      %1183 = vmatprep.subr.mxu0 0.0
      %1184 = vmatpush2.xpose.msra.mxu0 0.0
      %1185 = vmatprep.subr.mxu0 0.0
      %1186 = vmatpush2.xpose.msra.mxu0 0.0
      %1187 = vmatprep.subr.mxu0 0.0
      %1188 = vmatpush2.xpose.msra.mxu0 0.0
      %1189 = vmatprep.subr.mxu0 0.0
      %1190 = vmatpush2.xpose.msra.mxu0 0.0
      %1191 = vmatprep.subr.mxu0 0.0
      %1192 = vmatpush2.xpose.msra.mxu0 0.0
      %1193 = vmatprep.subr.mxu0 0.0
      %1194 = vmatpush2.xpose.msra.mxu0 0.0
      %1195 = vmatprep.mubr.f32.mxu0 0.0
      %1196 = vmatmul.mubr.f32.gmra.mxu0 %v1105
      %v1197 = vpop.f32.mrf.mxu0
      %v1198 = vadd.f32 0.0, %v1197
      %v1199 = vpop.f32.mrf.mxu0
      %1200 = vdwg.mxu0
      %v1201 = vadd.f32 %v1092, %v1198
      %v1202 = vld [vmem:[%s984 + $0x1] sm:$0xff]
      %v1203 = vld [vmem:[%s984 + $0x11] sm:$0xff]
      %v1204 = vld [vmem:[%s984 + $0x21] sm:$0xff]
      %v1205 = vld [vmem:[%s984 + $0x31] sm:$0xff]
      %v1206 = vld [vmem:[%s984 + $0x41] sm:$0xff]
      %v1207 = vld [vmem:[%s984 + $0x51] sm:$0xff]
      %v1208 = vld [vmem:[%s984 + $0x61] sm:$0xff]
      %v1209 = vld [vmem:[%s984 + $0x71] sm:$0xff]
      %s1210 = scalar_lea.vmem %s4, 64
      %v1211 = vld [vmem:[%s1210] sm:$0xff]
      %v1213 = vsel %vm353, %v1211, 0
      %v1216 = vsel %vm353, %v1202, 0
      %v1219 = vsel %vm353, %v1203, 0
      %v1222 = vsel %vm353, %v1204, 0
      %v1225 = vsel %vm353, %v1205, 0
      %v1228 = vsel %vm353, %v1206, 0
      %v1231 = vsel %vm353, %v1207, 0
      %v1234 = vsel %vm353, %v1208, 0
      %v1237 = vsel %vm353, %v1209, 0
      %1239 = vmatprep.subr.mxu0 0.0
      %1240 = vmatpush1.xpose.msra.mxu0 0.0
      %1241 = vmatprep.subr.mxu0 0.0
      %1242 = vmatpush1.xpose.msra.mxu0 0.0
      %1243 = vmatprep.subr.mxu0 0.0
      %1244 = vmatpush1.xpose.msra.mxu0 0.0
      %1245 = vmatprep.subr.mxu0 0.0
      %1246 = vmatpush1.xpose.msra.mxu0 0.0
      %1247 = vmatprep.subr.mxu0 0.0
      %1248 = vmatpush1.xpose.msra.mxu0 0.0
      %1249 = vmatprep.subr.mxu0 0.0
      %1250 = vmatpush1.xpose.msra.mxu0 0.0
      %1251 = vmatprep.subr.mxu0 0.0
      %1252 = vmatpush1.xpose.msra.mxu0 0.0
      %1253 = vmatprep.subr.mxu0 0.0
      %1254 = vmatpush1.xpose.msra.mxu0 0.0
      %1255 = vmatprep.subr.mxu0 0.0
      %1256 = vmatpush1.xpose.msra.mxu0 %v1237
      %1257 = vmatprep.subr.mxu0 0.0
      %1258 = vmatpush1.xpose.msra.mxu0 %v1234
      %1259 = vmatprep.subr.mxu0 0.0
      %1260 = vmatpush1.xpose.msra.mxu0 %v1231
      %1261 = vmatprep.subr.mxu0 0.0
      %1262 = vmatpush1.xpose.msra.mxu0 %v1228
      %1263 = vmatprep.subr.mxu0 0.0
      %1264 = vmatpush1.xpose.msra.mxu0 %v1225
      %1265 = vmatprep.subr.mxu0 0.0
      %1266 = vmatpush1.xpose.msra.mxu0 %v1222
      %1267 = vmatprep.subr.mxu0 0.0
      %1268 = vmatpush1.xpose.msra.mxu0 %v1219
      %1269 = vmatprep.subr.mxu0 0.0
      %1270 = vmatpush1.xpose.msra.mxu0 %v1216
      %1271 = vmatprep.subr.mxu0 0.0
      %1272 = vmatpush2.xpose.msra.mxu0 0.0
      %1273 = vmatprep.subr.mxu0 0.0
      %1274 = vmatpush2.xpose.msra.mxu0 0.0
      %1275 = vmatprep.subr.mxu0 0.0
      %1276 = vmatpush2.xpose.msra.mxu0 0.0
      %1277 = vmatprep.subr.mxu0 0.0
      %1278 = vmatpush2.xpose.msra.mxu0 0.0
      %1279 = vmatprep.subr.mxu0 0.0
      %1280 = vmatpush2.xpose.msra.mxu0 0.0
      %1281 = vmatprep.subr.mxu0 0.0
      %1282 = vmatpush2.xpose.msra.mxu0 0.0
      %1283 = vmatprep.subr.mxu0 0.0
      %1284 = vmatpush2.xpose.msra.mxu0 0.0
      %1285 = vmatprep.subr.mxu0 0.0
      %1286 = vmatpush2.xpose.msra.mxu0 0.0
      %1287 = vmatprep.subr.mxu0 0.0
      %1288 = vmatpush2.xpose.msra.mxu0 0.0
      %1289 = vmatprep.subr.mxu0 0.0
      %1290 = vmatpush2.xpose.msra.mxu0 0.0
      %1291 = vmatprep.subr.mxu0 0.0
      %1292 = vmatpush2.xpose.msra.mxu0 0.0
      %1293 = vmatprep.subr.mxu0 0.0
      %1294 = vmatpush2.xpose.msra.mxu0 0.0
      %1295 = vmatprep.subr.mxu0 0.0
      %1296 = vmatpush2.xpose.msra.mxu0 0.0
      %1297 = vmatprep.subr.mxu0 0.0
      %1298 = vmatpush2.xpose.msra.mxu0 0.0
      %1299 = vmatprep.subr.mxu0 0.0
      %1300 = vmatpush2.xpose.msra.mxu0 0.0
      %1301 = vmatprep.subr.mxu0 0.0
      %1302 = vmatpush2.xpose.msra.mxu0 0.0
      %1303 = vmatprep.mubr.f32.mxu0 0.0
      %1304 = vmatmul.mubr.f32.gmra.mxu0 %v1213
      %v1305 = vpop.f32.mrf.mxu0
      %v1306 = vadd.f32 0.0, %v1305
      %v1307 = vpop.f32.mrf.mxu0
      %1308 = vdwg.mxu0
      %v1309 = vadd.f32 %v1201, %v1306
      %v1310 = vld [vmem:[%s5] sm:$0xff]
      %1312 = vset.pattern.permute.xlu0 0
      %1313 = vperm.xlu0 %1312, %v1310
      %v1314 = vpop.permute.xlu0 %1313
      %v1316 = vadd.f32 %v1309, %v1314
      %vm1317 = vcmp.gt.f32.partialorder %v1316, 0.0
      %v1318 = vmul.f32 %v1316, 0.01
      %v1319 = vsel %vm1317, %v1316, %v1318
      %vm1320 = vcmask 523264
      %1321 = vst.msk [vmem:[%s329] sm:$0xff] %vm1320, %v1319
      %p1322 = scmp.lt.s32.totalorder %s21, 1
      %s1323 = scalar_select %p1322, %s21, 1
      %p1324 = scmp.lt.s32.totalorder %s22, 0
      %s1325 = scalar_select %p1324, %s22, 0
      %s1326 = sadd.s32 %s1325, %s1323
      %s1327 = smul.addr %s1326, 8
      %s1328 = scalar_lea.vmem %s6, %s1327
      // Predicated region
      $region45: #{leaky_relu_conv2d.1} parent=43 // pred_check
        %p1329 = pneg %p195
      $region46: #{leaky_relu_conv2d.1} parent=43 // pred_check_branch
        %1331 = sbr.rel (%p1329) target = $region48
      $region47: #{leaky_relu_conv2d.1} parent=43 // pred_region
        _
      $region48: #{leaky_relu_conv2d.1} parent=43 // pred_fallthru
        _
    $region44: #{leaky_relu_conv2d.1} parent=5 // pred_fallthru
      _
    %p1332 = scmp.le.s32.totalorder 2, %s12
    // Predicated region
    $region49: #{leaky_relu_conv2d.1} parent=5 // pred_check
      %p1333 = pneg %p1332
    $region50: #{leaky_relu_conv2d.1} parent=5 // pred_check_branch
      %1335 = sbr.rel (%p1333) target = $region52
    $region51: #{leaky_relu_conv2d.1} parent=5 // pred_region
      %s1336 = ssub.s32 %s12, 2
      // Predicated region
      $region53: #{leaky_relu_conv2d.1} parent=51 // pred_check
        %p1337 = pneg %p201
      $region54: #{leaky_relu_conv2d.1} parent=51 // pred_check_branch
        %1339 = sbr.rel (%p1337) target = $region56
      $region55: #{leaky_relu_conv2d.1} parent=51 // pred_region
        %p1340 = scmp.lt.s32.totalorder %s23, 1
        %s1341 = scalar_select %p1340, %s23, 1
        %p1342 = scmp.lt.s32.totalorder %s24, 0
        %s1343 = scalar_select %p1342, %s24, 0
        %s1344 = sadd.s32 %s1343, %s1341
        %s1345 = smul.addr %s1344, 8
        %s1346 = scalar_lea.vmem %s6, %s1345
      $region56: #{leaky_relu_conv2d.1} parent=51 // pred_fallthru
        _
    $region52: #{leaky_relu_conv2d.1} parent=5 // pred_fallthru
      _
  $region6: #{leaky_relu_conv2d.1} parent=0 // loop_footer
    %s16 = sadd.s32 1, %s12
  $region7: #{leaky_relu_conv2d.1} parent=0 // loop_footer_branch
    %11 = sbr.rel target = $region3
  $region8: #{leaky_relu_conv2d.1} parent=0 // loop_exit
    _

</llo_original>
